<compile_context>
chip_gen: v6e
topology: v6e:2x2x1
jax: 0.10.0
libtpu: 0.0.40
codegen_flags: <defaults>
</compile_context>

<pallas_src>
import functools
import math

import jax
import jax.numpy as jnp
import numpy as np
from jax.experimental import pallas as pl
from jax.experimental.pallas import tpu as pltpu


_ACTIVATIONS = {
    "tanh": jnp.tanh,
    "relu": lambda x: jnp.maximum(x, jnp.zeros_like(x)),
}


def actor_kernel(x_ref, *refs, num_layers, act_dtype, mm_dtype, act_fn):
    """One batch tile of the lane-folded Actor MLP + folded log_softmax."""
    wb_refs = refs[: 2 * num_layers]      # W1,b1,...,WL,bL (block-diagonal)
    s_ref = refs[2 * num_layers]          # (f*out, f*out) 0/1 segment-sum mat
    o_ref = refs[2 * num_layers + 1]      # packed log-prob output tile

    h = x_ref[...]                                     # (gt, f*in) mm dtype
    for layer in range(num_layers):
        w_ref = wb_refs[2 * layer]
        b_ref = wb_refs[2 * layer + 1]
        h = jnp.dot(h, w_ref[...], preferred_element_type=jnp.float32)
        h = h + b_ref[...]                             # fp32 bias add
        if layer < num_layers - 1:
            # Lane-dense activation; bf16 on v6e/v7x, fp32 on v5e.
            h = act_fn(h.astype(act_dtype)).astype(mm_dtype)

    logits = h                                         # (gt, f*out) fp32
    # Folded log_softmax: subtracting the packed-row max is exact (one shared
    # constant per out_dim-wide segment; with tanh, |logits| is bounded so the
    # cross-segment spread within a packed row stays tiny).  The per-segment
    # sum of exp() is a single small matmul with a block-diagonal ones matrix.
    m = jnp.max(logits, axis=-1, keepdims=True)
    z = logits - m
    e = jnp.exp(z)
    seg_sum = jnp.dot(e, s_ref[...], preferred_element_type=jnp.float32)
    o_ref[...] = (z - jnp.log(seg_sum)).astype(o_ref.dtype)


def _round_up(x, m):
    return ((x + m - 1) // m) * m


def _tpu_chip_info():
    """Best-effort (tensorcores_per_chip, bf16_activations_ok)."""
    try:
        kind = jax.devices()[0].device_kind.lower()
    except Exception:
        return 1, False
    if "v7" in kind:
        return 2, True            # 2 TCs/chip, bf16 VPU/EUP
    if "v6" in kind:
        return 1, True            # bf16 VPU/EUP
    return 1, False               # v5e and older: keep activations fp32


def _choose_fold(out_dim, layer_dims, itemsize):
    """Smallest fold making f*out_dim a multiple of 128 lanes, capped so the
    largest block-diagonal weight stays comfortably VMEM resident."""
    f = 128 // math.gcd(out_dim, 128)
    max_pair = max(a * b for a, b in zip(layer_dims[:-1], layer_dims[1:]))
    while f > 1 and f * f * max_pair * itemsize > (4 << 20):
        f //= 2
    return max(f, 1)


def _block_diag(w, f):
    return w if f == 1 else jax.scipy.linalg.block_diag(*([w] * f))


def actor_forward(obs, ref, params, *, activation="tanh", batch_tile=4096,
                  matmul_dtype=jnp.bfloat16, act_dtype=None,
                  out_dtype=jnp.float32, fold=None):
    """JAX wrapper: fold ref into bias, lane-fold the MLP, call the kernel."""
    weights = list(params[0::2])
    biases = list(params[1::2])
    num_layers = len(weights)
    obs_dim = obs.shape[-1]
    ref_dim = ref.shape[-1]
    out_dim = int(weights[-1].shape[-1])
    lead_shape = obs.shape[:-1]

    mm_dtype = np.dtype(matmul_dtype)
    num_tc, bf16_act_ok = _tpu_chip_info()
    if act_dtype is None:
        act_dtype = (jnp.bfloat16
                     if (mm_dtype == np.dtype(jnp.bfloat16) and bf16_act_ok)
                     else jnp.float32)
    if mm_dtype == np.dtype(jnp.float32):
        act_dtype = jnp.float32           # exact path: keep everything fp32
    act_fn = _ACTIVATIONS[activation]

    # ---- fold the broadcast ref row into the first-layer bias (fp32) --------
    w1, b1 = weights[0], biases[0]
    if all(int(d) == 1 for d in ref.shape[:-1]):
        ref_row = ref.reshape(1, ref_dim).astype(jnp.float32)
        b1_eff = (b1.astype(jnp.float32)
                  + ref_row @ w1[obs_dim:, :].astype(jnp.float32))
        w1_eff = w1[:obs_dim, :]
        x2d = obs.reshape(-1, obs_dim)
    else:
        # TODO(synk): per-row ref fallback still materializes the concat in
        # the wrapper; streaming obs/ref as two kernel inputs would halve the
        # input-side HBM traffic on this path.
        concat_shape = obs.shape[:-1] + (ref_dim,)
        x = jnp.concatenate([obs, jnp.broadcast_to(ref, concat_shape)], axis=-1)
        x2d = x.reshape(-1, obs_dim + ref_dim)
        w1_eff = w1
        b1_eff = b1.astype(jnp.float32)
    weights = [w1_eff] + weights[1:]
    biases = [b1_eff] + biases[1:]

    in_dim = int(x2d.shape[-1])
    B = int(x2d.shape[0])
    layer_dims = [in_dim] + [int(w.shape[-1]) for w in weights]

    # ---- lane-fold factor and batch tiling -----------------------------------
    f = fold if fold is not None else _choose_fold(out_dim, layer_dims,
                                                   mm_dtype.itemsize)
    sublane = 16 if mm_dtype.itemsize == 2 else 8
    align = sublane * f                    # original rows per sublane-aligned block
    bt = _round_up(min(batch_tile, _round_up(B, align)), align)
    B_pad = _round_up(B, bt)
    # v7x only: give both TensorCores separate grid steps when a single big
    # tile would otherwise serialize on one core (pure overhead on 1-TC chips).
    if (num_tc >= 2 and B_pad == bt and (bt // align) % 2 == 0
            and bt // 2 >= 2048):
        bt //= 2
    num_tiles = B_pad // bt
    gt = bt // f                           # packed rows per grid step
    G_pad = B_pad // f

    # ---- folded operands ------------------------------------------------------
    x2d = x2d.astype(mm_dtype)
    if B_pad != B:
        x2d = jnp.pad(x2d, ((0, B_pad - B), (0, 0)))
    x_folded = x2d.reshape(G_pad, f * in_dim)          # contiguous -> free

    wb = []
    for w, b in zip(weights, biases):
        wb.append(_block_diag(w.astype(mm_dtype), f))
        wb.append(jnp.tile(b.reshape(1, -1).astype(jnp.float32), (1, f)))
    seg = _block_diag(jnp.ones((out_dim, out_dim), jnp.float32), f)

    kernel = functools.partial(actor_kernel, num_layers=num_layers,
                               act_dtype=act_dtype, mm_dtype=mm_dtype,
                               act_fn=act_fn)

    in_specs = [pl.BlockSpec((gt, f * in_dim), lambda i: (i, 0))]  # streamed x
    for w, b in zip(wb[0::2], wb[1::2]):
        # Weights / biases: constant index_map -> loaded once, VMEM resident.
        in_specs.append(pl.BlockSpec(tuple(w.shape), lambda i: (0, 0)))
        in_specs.append(pl.BlockSpec(tuple(b.shape), lambda i: (0, 0)))
    in_specs.append(pl.BlockSpec(tuple(seg.shape), lambda i: (0, 0)))

    out = pl.pallas_call(
        kernel,
        out_shape=jax.ShapeDtypeStruct((G_pad, f * out_dim), out_dtype),
        grid_spec=pltpu.PrefetchScalarGridSpec(
            num_scalar_prefetch=0,
            grid=(num_tiles,),
            in_specs=in_specs,
            out_specs=pl.BlockSpec((gt, f * out_dim), lambda i: (i, 0)),
        ),
        compiler_params=pltpu.CompilerParams(
            dimension_semantics=("parallel",)),
    )(x_folded, *wb, seg)

    # Packed row r holds original rows r*f .. r*f+f-1 -> plain reshape unpacks.
    out = out.reshape(B_pad, out_dim)[:B]
    return out.reshape(lead_shape + (out_dim,))


def init_params(key, input_dim, hidden_dims, output_dim):
    """Deterministic synthetic params (PyTorch Linear shapes, stored transposed)."""
    dims = [input_dim] + list(hidden_dims) + [output_dim]
    params = []
    for d_in, d_out in zip(dims[:-1], dims[1:]):
        key, kw, kb = jax.random.split(key, 3)
        bound = 1.0 / math.sqrt(d_in)
        w = jax.random.uniform(kw, (d_in, d_out), jnp.float32, -bound, bound)
        b = jax.random.uniform(kb, (1, d_out), jnp.float32, -bound, bound)
        params.extend([w, b])
    return tuple(params)


def actor_reference(obs, ref, params, activation="tanh"):
    """Pure-JAX fp32 (HIGHEST precision) reference with the concat semantics."""
    act = _ACTIVATIONS[activation]
    weights, biases = params[0::2], params[1::2]
    concat_shape = obs.shape[:-1] + ref.shape[-1:]
    h = jnp.concatenate([obs, jnp.broadcast_to(ref, concat_shape)], axis=-1)
    n = len(weights)
    for i, (w, b) in enumerate(zip(weights, biases)):
        h = jnp.dot(h, w, precision=jax.lax.Precision.HIGHEST) + b
        if i < n - 1:
            h = act(h)
    return jax.nn.log_softmax(h, axis=-1)


if __name__ == "__main__":
    # Small shapes consistent with the module: obs_dim=16, ref_dim=16 ->
    # input_dim=32, hidden_dims=[32, 32], output_dim=8 (action logits).
    batch = 8
    obs_dim, ref_dim = 16, 16
    hidden_dims = [32, 32]
    output_dim = 8

    key = jax.random.PRNGKey(0)
    k_obs, k_ref, k_par, k_ref2 = jax.random.split(key, 4)
    obs = jax.random.normal(k_obs, (batch, obs_dim), jnp.float32)
    ref = jax.random.normal(k_ref, (1, ref_dim), jnp.float32)   # broadcast row
    params = init_params(k_par, obs_dim + ref_dim, hidden_dims, output_dim)

    # Default path: bf16 MXU operands, fp32 accumulation (activations bf16 on
    # v6e/v7x, fp32 elsewhere).
    out = jax.block_until_ready(actor_forward(obs, ref, params))
    assert out.shape == (batch, output_dim)

    # Exact fp32 path.
    out_f32 = jax.block_until_ready(
        actor_forward(obs, ref, params, matmul_dtype=jnp.float32))

    ref_out = actor_reference(obs, ref, params)
    assert jnp.allclose(out_f32, ref_out, atol=5e-3, rtol=5e-3)
    assert jnp.allclose(out, ref_out, atol=7e-2, rtol=7e-2)
    # log_softmax rows should sum (in prob space) to ~1
    assert jnp.allclose(jnp.sum(jnp.exp(out), axis=-1), 1.0, atol=1e-4)

    # Per-row ref fallback (explicit concat path), exact fp32.
    ref_rows = jax.random.normal(k_ref2, (batch, ref_dim), jnp.float32)
    out_rows = jax.block_until_ready(
        actor_forward(obs, ref_rows, params, matmul_dtype=jnp.float32))
    assert jnp.allclose(out_rows, actor_reference(obs, ref_rows, params),
                        atol=5e-3, rtol=5e-3)

    print("KERNEL_OK")
</pallas_src>

<mosaic_0001>
module attributes {stable_mosaic.version = 11 : i64} {
  func.func @actor_kernel(%arg0: i32, %arg1: memref<16x256xbf16, #tpu.memory_space<vmem>>, %arg2: memref<256x512xbf16, #tpu.memory_space<vmem>>, %arg3: memref<1x512xf32, #tpu.memory_space<vmem>>, %arg4: memref<512x512xbf16, #tpu.memory_space<vmem>>, %arg5: memref<1x512xf32, #tpu.memory_space<vmem>>, %arg6: memref<512x128xbf16, #tpu.memory_space<vmem>>, %arg7: memref<1x128xf32, #tpu.memory_space<vmem>>, %arg8: memref<128x128xf32, #tpu.memory_space<vmem>>, %arg9: memref<16x128xf32, #tpu.memory_space<vmem>>) attributes {dimension_semantics = [#tpu.dimension_semantics<parallel>], iteration_bounds = array<i64: 1>, scalar_prefetch = 0 : i64, scratch_operands = 0 : i64, tpu.core_type = #tpu.core_type<tc>, window_params = [{transform_indices = @transform_0, window_bounds = array<i64: 16, 256>}, {pipeline_mode = #tpu.pipeline_mode<synchronous>, transform_indices = @transform_1, window_bounds = array<i64: 256, 512>}, {pipeline_mode = #tpu.pipeline_mode<synchronous>, transform_indices = @transform_2, window_bounds = array<i64: 1, 512>}, {pipeline_mode = #tpu.pipeline_mode<synchronous>, transform_indices = @transform_3, window_bounds = array<i64: 512, 512>}, {pipeline_mode = #tpu.pipeline_mode<synchronous>, transform_indices = @transform_4, window_bounds = array<i64: 1, 512>}, {pipeline_mode = #tpu.pipeline_mode<synchronous>, transform_indices = @transform_5, window_bounds = array<i64: 512, 128>}, {pipeline_mode = #tpu.pipeline_mode<synchronous>, transform_indices = @transform_6, window_bounds = array<i64: 1, 128>}, {pipeline_mode = #tpu.pipeline_mode<synchronous>, transform_indices = @transform_7, window_bounds = array<i64: 128, 128>}, {transform_indices = @transform_8, window_bounds = array<i64: 16, 128>}]} {
    %c0 = arith.constant 0 : index
    %c0_0 = arith.constant 0 : index
    %0 = vector.load %arg1[%c0, %c0_0] : memref<16x256xbf16, #tpu.memory_space<vmem>>, vector<16x256xbf16>
    %c0_1 = arith.constant 0 : index
    %c0_2 = arith.constant 0 : index
    %1 = vector.load %arg2[%c0_1, %c0_2] : memref<256x512xbf16, #tpu.memory_space<vmem>>, vector<256x512xbf16>
    %cst = arith.constant dense<0.000000e+00> : vector<16x512xf32>
    %2 = tpu.matmul %0, %1, %cst {dimension_numbers = #tpu.dot_dimension_numbers<[1], [0], [0], [1], [0, 0, 1, 1], [], []>} : vector<16x256xbf16>, vector<256x512xbf16>, vector<16x512xf32> -> vector<16x512xf32>
    %c0_3 = arith.constant 0 : index
    %c0_4 = arith.constant 0 : index
    %3 = vector.load %arg3[%c0_3, %c0_4] : memref<1x512xf32, #tpu.memory_space<vmem>>, vector<1x512xf32>
    %4 = vector.broadcast %3 : vector<1x512xf32> to vector<16x512xf32>
    %5 = arith.addf %2, %4 : vector<16x512xf32>
    %6 = math.tanh %5 : vector<16x512xf32>
    %7 = arith.truncf %6 : vector<16x512xf32> to vector<16x512xbf16>
    %c0_5 = arith.constant 0 : index
    %c0_6 = arith.constant 0 : index
    %8 = vector.load %arg4[%c0_5, %c0_6] : memref<512x512xbf16, #tpu.memory_space<vmem>>, vector<512x512xbf16>
    %cst_7 = arith.constant dense<0.000000e+00> : vector<16x512xf32>
    %9 = tpu.matmul %7, %8, %cst_7 {dimension_numbers = #tpu.dot_dimension_numbers<[1], [0], [0], [1], [0, 0, 1, 1], [], []>} : vector<16x512xbf16>, vector<512x512xbf16>, vector<16x512xf32> -> vector<16x512xf32>
    %c0_8 = arith.constant 0 : index
    %c0_9 = arith.constant 0 : index
    %10 = vector.load %arg5[%c0_8, %c0_9] : memref<1x512xf32, #tpu.memory_space<vmem>>, vector<1x512xf32>
    %11 = vector.broadcast %10 : vector<1x512xf32> to vector<16x512xf32>
    %12 = arith.addf %9, %11 : vector<16x512xf32>
    %13 = math.tanh %12 : vector<16x512xf32>
    %14 = arith.truncf %13 : vector<16x512xf32> to vector<16x512xbf16>
    %c0_10 = arith.constant 0 : index
    %c0_11 = arith.constant 0 : index
    %15 = vector.load %arg6[%c0_10, %c0_11] : memref<512x128xbf16, #tpu.memory_space<vmem>>, vector<512x128xbf16>
    %cst_12 = arith.constant dense<0.000000e+00> : vector<16x128xf32>
    %16 = tpu.matmul %14, %15, %cst_12 {dimension_numbers = #tpu.dot_dimension_numbers<[1], [0], [0], [1], [0, 0, 1, 1], [], []>} : vector<16x512xbf16>, vector<512x128xbf16>, vector<16x128xf32> -> vector<16x128xf32>
    %c0_13 = arith.constant 0 : index
    %c0_14 = arith.constant 0 : index
    %17 = vector.load %arg7[%c0_13, %c0_14] : memref<1x128xf32, #tpu.memory_space<vmem>>, vector<1x128xf32>
    %18 = vector.broadcast %17 : vector<1x128xf32> to vector<16x128xf32>
    %19 = arith.addf %16, %18 : vector<16x128xf32>
    %cst_15 = arith.constant dense<0xFF800000> : vector<16xf32>
    %20 = vector.multi_reduction <maximumf>, %19, %cst_15 [1] : vector<16x128xf32> to vector<16xf32>
    %21 = vector.shape_cast %20 : vector<16xf32> to vector<16x1xf32>
    %22 = vector.broadcast %21 : vector<16x1xf32> to vector<16x128xf32>
    %23 = arith.subf %19, %22 : vector<16x128xf32>
    %24 = math.exp %23 : vector<16x128xf32>
    %c0_16 = arith.constant 0 : index
    %c0_17 = arith.constant 0 : index
    %25 = vector.load %arg8[%c0_16, %c0_17] : memref<128x128xf32, #tpu.memory_space<vmem>>, vector<128x128xf32>
    %cst_18 = arith.constant dense<0.000000e+00> : vector<16x128xf32>
    %26 = tpu.matmul %24, %25, %cst_18 {dimension_numbers = #tpu.dot_dimension_numbers<[1], [0], [0], [1], [0, 0, 1, 1], [], []>} : vector<16x128xf32>, vector<128x128xf32>, vector<16x128xf32> -> vector<16x128xf32>
    %27 = math.log %26 : vector<16x128xf32>
    %28 = arith.subf %23, %27 : vector<16x128xf32>
    %c0_19 = arith.constant 0 : index
    %c0_20 = arith.constant 0 : index
    %29 = vector.load %arg9[%c0_19, %c0_20] : memref<16x128xf32, #tpu.memory_space<vmem>>, vector<16x128xf32>
    tpu.vector_store %arg9[%c0_19, %c0_20], %28 {strides = array<i32>} : memref<16x128xf32, #tpu.memory_space<vmem>>, vector<16x128xf32>,
    return
  }
  func.func @transform_0(%arg0: i32) -> (i32, i32) {
    %c0_i32 = arith.constant 0 : i32
    %c0_i32_0 = arith.constant 0 : i32
    return %arg0, %c0_i32 : i32, i32
  }
  func.func @transform_1(%arg0: i32) -> (i32, i32) {
    %c0_i32 = arith.constant 0 : i32
    %c0_i32_0 = arith.constant 0 : i32
    %c0_i32_1 = arith.constant 0 : i32
    return %c0_i32, %c0_i32_0 : i32, i32
  }
  func.func @transform_2(%arg0: i32) -> (i32, i32) {
    %c0_i32 = arith.constant 0 : i32
    %c0_i32_0 = arith.constant 0 : i32
    %c0_i32_1 = arith.constant 0 : i32
    return %c0_i32, %c0_i32_0 : i32, i32
  }
  func.func @transform_3(%arg0: i32) -> (i32, i32) {
    %c0_i32 = arith.constant 0 : i32
    %c0_i32_0 = arith.constant 0 : i32
    %c0_i32_1 = arith.constant 0 : i32
    return %c0_i32, %c0_i32_0 : i32, i32
  }
  func.func @transform_4(%arg0: i32) -> (i32, i32) {
    %c0_i32 = arith.constant 0 : i32
    %c0_i32_0 = arith.constant 0 : i32
    %c0_i32_1 = arith.constant 0 : i32
    return %c0_i32, %c0_i32_0 : i32, i32
  }
  func.func @transform_5(%arg0: i32) -> (i32, i32) {
    %c0_i32 = arith.constant 0 : i32
    %c0_i32_0 = arith.constant 0 : i32
    %c0_i32_1 = arith.constant 0 : i32
    return %c0_i32, %c0_i32_0 : i32, i32
  }
  func.func @transform_6(%arg0: i32) -> (i32, i32) {
    %c0_i32 = arith.constant 0 : i32
    %c0_i32_0 = arith.constant 0 : i32
    %c0_i32_1 = arith.constant 0 : i32
    return %c0_i32, %c0_i32_0 : i32, i32
  }
  func.func @transform_7(%arg0: i32) -> (i32, i32) {
    %c0_i32 = arith.constant 0 : i32
    %c0_i32_0 = arith.constant 0 : i32
    %c0_i32_1 = arith.constant 0 : i32
    return %c0_i32, %c0_i32_0 : i32, i32
  }
  func.func @transform_8(%arg0: i32) -> (i32, i32) {
    %c0_i32 = arith.constant 0 : i32
    %c0_i32_0 = arith.constant 0 : i32
    return %arg0, %c0_i32 : i32, i32
  }
}

</mosaic_0001>

<llo_original>
// kernel: tpu_custom_call.1
$region0: #{tpu_custom_call.1}
  #allocation0 [shape = 'u32[]', space=smem, size = 0x4, offset = 0x4, fixed_abs, tag = 'smem constant byte address 0x4 - core index']
  #allocation1 [shape = 'u32[144,128]{1,0:T(1,128)}', space=vmem, size = 0x12000, scoped, tag = 'internal scratch']
  %s0 = inlined_call_operand.hbm [shape: bf16[16,256], index: 0, kind: input, shape index: {}]
  %s1 = inlined_call_operand.hbm [shape: bf16[256,512], index: 1, kind: input, shape index: {}]
  %s2 = inlined_call_operand.hbm [shape: f32[1,512], index: 2, kind: input, shape index: {}]
  %s3 = inlined_call_operand.hbm [shape: bf16[512,512], index: 3, kind: input, shape index: {}]
  %s4 = inlined_call_operand.vmem [shape: f32[1,512], index: 4, kind: input, shape index: {}]
  %s5 = inlined_call_operand.hbm [shape: bf16[512,128], index: 5, kind: input, shape index: {}]
  %s6 = inlined_call_operand.vmem [shape: f32[1,128], index: 6, kind: input, shape index: {}]
  %s7 = inlined_call_operand.hbm [shape: f32[128,128], index: 7, kind: input, shape index: {}]
  %s8 = inlined_call_operand.hbm [shape: f32[16,128], index: 8, kind: output, shape index: {}]
  %s9 = sld [smem:[#allocation0]]
  $region66: #{tpu_custom_call.1} parent=0
    _
  %s11 = ssub.s32 1, %s9
  %s12 = scalar_select 0, %s11, %s9
  $region1: #{tpu_custom_call.1} parent=0
    #allocation2 [shape = 'u8[8192]{0}', space=vmem, size = 0x2000, scoped, tag = 'input window, operand 0, single buffered']
    #allocation3 [shape = 's32[1]{0}', space=sflag, size = 0x4, scoped, tag = 'scoped memory for tpu_custom_call.1']
    #allocation4 [shape = 's32[1]{0}', space=sflag, size = 0x4, scoped, tag = 'scoped memory for tpu_custom_call.1']
    #allocation5 [shape = 'u8[262144]{0}', space=vmem, size = 0x40000, scoped, tag = 'input window, operand 1, single buffered']
    #allocation6 [shape = 's32[1]{0}', space=sflag, size = 0x4, scoped, tag = 'scoped memory for tpu_custom_call.1']
    #allocation7 [shape = 'u8[2048]{0}', space=vmem, size = 0x800, scoped, tag = 'input window, operand 2, single buffered']
    #allocation8 [shape = 'u8[524288]{0}', space=vmem, size = 0x80000, scoped, tag = 'input window, operand 3, single buffered']
    #allocation9 [shape = 's32[1]{0}', space=sflag, size = 0x4, scoped, tag = 'scoped memory for tpu_custom_call.1']
    #allocation10 [shape = 'u8[131072]{0}', space=vmem, size = 0x20000, scoped, tag = 'input window, operand 5, single buffered']
    #allocation11 [shape = 'u8[65536]{0}', space=vmem, size = 0x10000, scoped, tag = 'input window, operand 7, single buffered']
    #allocation12 [shape = 's32[1]{0}', space=sflag, size = 0x4, scoped, tag = 'scoped memory for tpu_custom_call.1']
    #allocation13 [shape = 'u8[8192]{0}', space=vmem, size = 0x2000, scoped, tag = 'output window, operand 0, single buffered']
    %13 = vsyncpa [#allocation3], 0
    %14 = vsyncpa [#allocation6], 0
    %15 = vsyncpa [#allocation9], 0
    %16 = vsyncpa [#allocation12], 0
    %17 = vsyncpa [#allocation4], 0
    // Predicated region
    $region2: #{tpu_custom_call.1} parent=1 // pred_check
      _
    $region3: #{tpu_custom_call.1} parent=1 // pred_check_branch
      %19 = sbr.rel (0) target = $region5
    $region4: #{tpu_custom_call.1} parent=1 // pred_region
      %s21 = ssub.s32 256, 256
      %22 = vsyncadd [#allocation3], %s21
      %s23 = sshll.u32 [#allocation2], 4
      %s24 = int_to_ptr.vmem [resolvable:$true] %s23
      %29 = dma.hbm_to_vmem [thread:$0]  %s0, 256, %s24, [#allocation3], 128, 128, 8
    $region5: #{tpu_custom_call.1} parent=1 // pred_fallthru
      _
    // Predicated region
    $region6: #{tpu_custom_call.1} parent=1 // pred_check
      _
    $region7: #{tpu_custom_call.1} parent=1 // pred_check_branch
      %31 = sbr.rel (0) target = $region9
    $region8: #{tpu_custom_call.1} parent=1 // pred_region
      %s33 = ssub.s32 8192, 8192
      %34 = vsyncadd [#allocation6], %s33
      %s35 = sshll.u32 [#allocation5], 4
      %s36 = int_to_ptr.vmem [resolvable:$true] %s35
      %41 = dma.hbm_to_vmem [thread:$0]  %s1, 8192, %s36, [#allocation6], 256, 256, 16
    $region9: #{tpu_custom_call.1} parent=1 // pred_fallthru
      _
    // Predicated region
    $region10: #{tpu_custom_call.1} parent=1 // pred_check
      _
    $region11: #{tpu_custom_call.1} parent=1 // pred_check_branch
      %43 = sbr.rel (0) target = $region13
    $region12: #{tpu_custom_call.1} parent=1 // pred_region
      %s45 = ssub.s32 64, 64
      %46 = vsyncadd [#allocation6], %s45
      %s48 = sshll.u32 [#allocation7], 4
      %s49 = int_to_ptr.vmem [resolvable:$true] %s48
      %51 = dma.hbm_to_vmem [thread:$0]  %s2, 64, %s49, [#allocation6]
    $region13: #{tpu_custom_call.1} parent=1 // pred_fallthru
      _
    // Predicated region
    $region14: #{tpu_custom_call.1} parent=1 // pred_check
      _
    $region15: #{tpu_custom_call.1} parent=1 // pred_check_branch
      %53 = sbr.rel (0) target = $region17
    $region16: #{tpu_custom_call.1} parent=1 // pred_region
      %s55 = ssub.s32 16384, 16384
      %56 = vsyncadd [#allocation9], %s55
      %s57 = sshll.u32 [#allocation8], 4
      %s58 = int_to_ptr.vmem [resolvable:$true] %s57
      %63 = dma.hbm_to_vmem [thread:$0]  %s3, 16384, %s58, [#allocation9], 256, 256, 16
    $region17: #{tpu_custom_call.1} parent=1 // pred_fallthru
      _
    // Predicated region
    $region18: #{tpu_custom_call.1} parent=1 // pred_check
      _
    $region19: #{tpu_custom_call.1} parent=1 // pred_check_branch
      %65 = sbr.rel (0) target = $region21
    $region20: #{tpu_custom_call.1} parent=1 // pred_region
      _
    $region21: #{tpu_custom_call.1} parent=1 // pred_fallthru
      _
    // Predicated region
    $region22: #{tpu_custom_call.1} parent=1 // pred_check
      _
    $region23: #{tpu_custom_call.1} parent=1 // pred_check_branch
      %67 = sbr.rel (0) target = $region25
    $region24: #{tpu_custom_call.1} parent=1 // pred_region
      %s69 = ssub.s32 4096, 4096
      %70 = vsyncadd [#allocation9], %s69
      %s71 = sshll.u32 [#allocation10], 4
      %s72 = int_to_ptr.vmem [resolvable:$true] %s71
      %77 = dma.hbm_to_vmem [thread:$0]  %s5, 4096, %s72, [#allocation9], 64, 64, 4
    $region25: #{tpu_custom_call.1} parent=1 // pred_fallthru
      _
    // Predicated region
    $region26: #{tpu_custom_call.1} parent=1 // pred_check
      _
    $region27: #{tpu_custom_call.1} parent=1 // pred_check_branch
      %79 = sbr.rel (0) target = $region29
    $region28: #{tpu_custom_call.1} parent=1 // pred_region
      _
    $region29: #{tpu_custom_call.1} parent=1 // pred_fallthru
      _
    // Predicated region
    $region30: #{tpu_custom_call.1} parent=1 // pred_check
      _
    $region31: #{tpu_custom_call.1} parent=1 // pred_check_branch
      %81 = sbr.rel (0) target = $region33
    $region32: #{tpu_custom_call.1} parent=1 // pred_region
      %s83 = ssub.s32 2048, 2048
      %84 = vsyncadd [#allocation12], %s83
      %s85 = sshll.u32 [#allocation11], 4
      %s86 = int_to_ptr.vmem [resolvable:$true] %s85
      %91 = dma.hbm_to_vmem [thread:$0]  %s7, 2048, %s86, [#allocation12], 128, 128, 8
    $region33: #{tpu_custom_call.1} parent=1 // pred_fallthru
      _
    // Predicated region
    $region34: #{tpu_custom_call.1} parent=1 // pred_check
      _
    $region35: #{tpu_custom_call.1} parent=1 // pred_check_branch
      %93 = sbr.rel (0) target = $region37
    $region36: #{tpu_custom_call.1} parent=1 // pred_region
      %94 = dma.done [#allocation3], 256
    $region37: #{tpu_custom_call.1} parent=1 // pred_fallthru
      _
    // Predicated region
    $region38: #{tpu_custom_call.1} parent=1 // pred_check
      _
    $region39: #{tpu_custom_call.1} parent=1 // pred_check_branch
      %96 = sbr.rel (0) target = $region41
    $region40: #{tpu_custom_call.1} parent=1 // pred_region
      %97 = dma.done [#allocation6], 8192
    $region41: #{tpu_custom_call.1} parent=1 // pred_fallthru
      _
    // Predicated region
    $region42: #{tpu_custom_call.1} parent=1 // pred_check
      _
    $region43: #{tpu_custom_call.1} parent=1 // pred_check_branch
      %99 = sbr.rel (0) target = $region45
    $region44: #{tpu_custom_call.1} parent=1 // pred_region
      %100 = dma.done [#allocation6], 64
    $region45: #{tpu_custom_call.1} parent=1 // pred_fallthru
      _
    // Predicated region
    $region46: #{tpu_custom_call.1} parent=1 // pred_check
      _
    $region47: #{tpu_custom_call.1} parent=1 // pred_check_branch
      %102 = sbr.rel (0) target = $region49
    $region48: #{tpu_custom_call.1} parent=1 // pred_region
      %103 = dma.done [#allocation9], 16384
    $region49: #{tpu_custom_call.1} parent=1 // pred_fallthru
      _
    // Predicated region
    $region50: #{tpu_custom_call.1} parent=1 // pred_check
      _
    $region51: #{tpu_custom_call.1} parent=1 // pred_check_branch
      %105 = sbr.rel (0) target = $region53
    $region52: #{tpu_custom_call.1} parent=1 // pred_region
      %106 = dma.done [#allocation9], 4096
    $region53: #{tpu_custom_call.1} parent=1 // pred_fallthru
      _
    // Predicated region
    $region54: #{tpu_custom_call.1} parent=1 // pred_check
      _
    $region55: #{tpu_custom_call.1} parent=1 // pred_check_branch
      %108 = sbr.rel (0) target = $region57
    $region56: #{tpu_custom_call.1} parent=1 // pred_region
      %109 = dma.done [#allocation12], 2048
    $region57: #{tpu_custom_call.1} parent=1 // pred_fallthru
      _
    %v111 = vld [vmem:[#allocation2] sm:$0xff]
    %v112 = vld [vmem:[#allocation2 + $0x8] sm:$0xff]
    %v113 = vld [vmem:[#allocation5] sm:$0xff]
    %v114 = vld [vmem:[#allocation5 + $0x8] sm:$0xff]
    %v115 = vld [vmem:[#allocation5 + $0x10] sm:$0xff]
    %v116 = vld [vmem:[#allocation5 + $0x18] sm:$0xff]
    %v117 = vld [vmem:[#allocation5 + $0x20] sm:$0xff]
    %v118 = vld [vmem:[#allocation5 + $0x28] sm:$0xff]
    %v119 = vld [vmem:[#allocation5 + $0x30] sm:$0xff]
    %v120 = vld [vmem:[#allocation5 + $0x38] sm:$0xff]
    %v121 = vld [vmem:[#allocation5 + $0x40] sm:$0xff]
    %v122 = vld [vmem:[#allocation5 + $0x48] sm:$0xff]
    %v123 = vld [vmem:[#allocation5 + $0x50] sm:$0xff]
    %v124 = vld [vmem:[#allocation5 + $0x58] sm:$0xff]
    %v125 = vld [vmem:[#allocation5 + $0x60] sm:$0xff]
    %v126 = vld [vmem:[#allocation5 + $0x68] sm:$0xff]
    %v127 = vld [vmem:[#allocation5 + $0x70] sm:$0xff]
    %v128 = vld [vmem:[#allocation5 + $0x78] sm:$0xff]
    %v129 = vld [vmem:[#allocation5 + $0x80] sm:$0xff]
    %v130 = vld [vmem:[#allocation5 + $0x88] sm:$0xff]
    %v131 = vld [vmem:[#allocation5 + $0x90] sm:$0xff]
    %v132 = vld [vmem:[#allocation5 + $0x98] sm:$0xff]
    %v133 = vld [vmem:[#allocation5 + $0xa0] sm:$0xff]
    %v134 = vld [vmem:[#allocation5 + $0xa8] sm:$0xff]
    %v135 = vld [vmem:[#allocation5 + $0xb0] sm:$0xff]
    %v136 = vld [vmem:[#allocation5 + $0xb8] sm:$0xff]
    %v137 = vld [vmem:[#allocation5 + $0xc0] sm:$0xff]
    %v138 = vld [vmem:[#allocation5 + $0xc8] sm:$0xff]
    %v139 = vld [vmem:[#allocation5 + $0xd0] sm:$0xff]
    %v140 = vld [vmem:[#allocation5 + $0xd8] sm:$0xff]
    %v141 = vld [vmem:[#allocation5 + $0xe0] sm:$0xff]
    %v142 = vld [vmem:[#allocation5 + $0xe8] sm:$0xff]
    %v143 = vld [vmem:[#allocation5 + $0xf0] sm:$0xff]
    %v144 = vld [vmem:[#allocation5 + $0xf8] sm:$0xff]
    %v145 = vld [vmem:[#allocation5 + $0x100] sm:$0xff]
    %v146 = vld [vmem:[#allocation5 + $0x108] sm:$0xff]
    %v147 = vld [vmem:[#allocation5 + $0x110] sm:$0xff]
    %v148 = vld [vmem:[#allocation5 + $0x118] sm:$0xff]
    %v149 = vld [vmem:[#allocation5 + $0x120] sm:$0xff]
    %v150 = vld [vmem:[#allocation5 + $0x128] sm:$0xff]
    %v151 = vld [vmem:[#allocation5 + $0x130] sm:$0xff]
    %v152 = vld [vmem:[#allocation5 + $0x138] sm:$0xff]
    %v153 = vld [vmem:[#allocation5 + $0x140] sm:$0xff]
    %v154 = vld [vmem:[#allocation5 + $0x148] sm:$0xff]
    %v155 = vld [vmem:[#allocation5 + $0x150] sm:$0xff]
    %v156 = vld [vmem:[#allocation5 + $0x158] sm:$0xff]
    %v157 = vld [vmem:[#allocation5 + $0x160] sm:$0xff]
    %v158 = vld [vmem:[#allocation5 + $0x168] sm:$0xff]
    %v159 = vld [vmem:[#allocation5 + $0x170] sm:$0xff]
    %v160 = vld [vmem:[#allocation5 + $0x178] sm:$0xff]
    %v161 = vld [vmem:[#allocation5 + $0x180] sm:$0xff]
    %v162 = vld [vmem:[#allocation5 + $0x188] sm:$0xff]
    %v163 = vld [vmem:[#allocation5 + $0x190] sm:$0xff]
    %v164 = vld [vmem:[#allocation5 + $0x198] sm:$0xff]
    %v165 = vld [vmem:[#allocation5 + $0x1a0] sm:$0xff]
    %v166 = vld [vmem:[#allocation5 + $0x1a8] sm:$0xff]
    %v167 = vld [vmem:[#allocation5 + $0x1b0] sm:$0xff]
    %v168 = vld [vmem:[#allocation5 + $0x1b8] sm:$0xff]
    %v169 = vld [vmem:[#allocation5 + $0x1c0] sm:$0xff]
    %v170 = vld [vmem:[#allocation5 + $0x1c8] sm:$0xff]
    %v171 = vld [vmem:[#allocation5 + $0x1d0] sm:$0xff]
    %v172 = vld [vmem:[#allocation5 + $0x1d8] sm:$0xff]
    %v173 = vld [vmem:[#allocation5 + $0x1e0] sm:$0xff]
    %v174 = vld [vmem:[#allocation5 + $0x1e8] sm:$0xff]
    %v175 = vld [vmem:[#allocation5 + $0x1f0] sm:$0xff]
    %v176 = vld [vmem:[#allocation5 + $0x1f8] sm:$0xff]
    %v177 = vld [vmem:[#allocation7] sm:$0xf]
    %v179 = vlaneseq
    %v180 = vshrl.u32 %v179, 7
    %v181 = vsub.s32 0, %v180
    %v182 = vrot.slane %v177, %v181
    %v183 = vlaneseq
    %v184 = vshrl.u32 %v183, 7
    %v185 = vsub.s32 1, %v184
    %v186 = vrot.slane %v177, %v185
    %v187 = vlaneseq
    %v188 = vshrl.u32 %v187, 7
    %v189 = vsub.s32 2, %v188
    %v190 = vrot.slane %v177, %v189
    %v191 = vlaneseq
    %v192 = vshrl.u32 %v191, 7
    %v193 = vsub.s32 3, %v192
    %v194 = vrot.slane %v177, %v193
    %v201 = vunpack.c.l.b16 %v111
    %v202 = vunpack.c.h.b16 %v111
    %v203 = vunpack.c.l.b16 %v112
    %v204 = vunpack.c.h.b16 %v112
    %v205 = vpack.c.b16 %v203, %v201
    %v206 = vpack.c.b16 %v204, %v202
    %v273 = vunpack.c.l.b16 %v113
    %v274 = vunpack.c.h.b16 %v113
    %v275 = vunpack.c.l.b16 %v114
    %v276 = vunpack.c.h.b16 %v114
    %v277 = vunpack.c.l.b16 %v115
    %v278 = vunpack.c.h.b16 %v115
    %v279 = vunpack.c.l.b16 %v116
    %v280 = vunpack.c.h.b16 %v116
    %v281 = vunpack.c.l.b16 %v117
    %v282 = vunpack.c.h.b16 %v117
    %v283 = vunpack.c.l.b16 %v118
    %v284 = vunpack.c.h.b16 %v118
    %v285 = vunpack.c.l.b16 %v119
    %v286 = vunpack.c.h.b16 %v119
    %v287 = vunpack.c.l.b16 %v120
    %v288 = vunpack.c.h.b16 %v120
    %v289 = vunpack.c.l.b16 %v121
    %v290 = vunpack.c.h.b16 %v121
    %v291 = vunpack.c.l.b16 %v122
    %v292 = vunpack.c.h.b16 %v122
    %v293 = vunpack.c.l.b16 %v123
    %v294 = vunpack.c.h.b16 %v123
    %v295 = vunpack.c.l.b16 %v124
    %v296 = vunpack.c.h.b16 %v124
    %v297 = vunpack.c.l.b16 %v125
    %v298 = vunpack.c.h.b16 %v125
    %v299 = vunpack.c.l.b16 %v126
    %v300 = vunpack.c.h.b16 %v126
    %v301 = vunpack.c.l.b16 %v127
    %v302 = vunpack.c.h.b16 %v127
    %v303 = vunpack.c.l.b16 %v128
    %v304 = vunpack.c.h.b16 %v128
    %v305 = vunpack.c.l.b16 %v129
    %v306 = vunpack.c.h.b16 %v129
    %v307 = vunpack.c.l.b16 %v130
    %v308 = vunpack.c.h.b16 %v130
    %v309 = vunpack.c.l.b16 %v131
    %v310 = vunpack.c.h.b16 %v131
    %v311 = vunpack.c.l.b16 %v132
    %v312 = vunpack.c.h.b16 %v132
    %v313 = vunpack.c.l.b16 %v133
    %v314 = vunpack.c.h.b16 %v133
    %v315 = vunpack.c.l.b16 %v134
    %v316 = vunpack.c.h.b16 %v134
    %v317 = vunpack.c.l.b16 %v135
    %v318 = vunpack.c.h.b16 %v135
    %v319 = vunpack.c.l.b16 %v136
    %v320 = vunpack.c.h.b16 %v136
    %v321 = vunpack.c.l.b16 %v137
    %v322 = vunpack.c.h.b16 %v137
    %v323 = vunpack.c.l.b16 %v138
    %v324 = vunpack.c.h.b16 %v138
    %v325 = vunpack.c.l.b16 %v139
    %v326 = vunpack.c.h.b16 %v139
    %v327 = vunpack.c.l.b16 %v140
    %v328 = vunpack.c.h.b16 %v140
    %v329 = vunpack.c.l.b16 %v141
    %v330 = vunpack.c.h.b16 %v141
    %v331 = vunpack.c.l.b16 %v142
    %v332 = vunpack.c.h.b16 %v142
    %v333 = vunpack.c.l.b16 %v143
    %v334 = vunpack.c.h.b16 %v143
    %v335 = vunpack.c.l.b16 %v144
    %v336 = vunpack.c.h.b16 %v144
    %v337 = vunpack.c.l.b16 %v145
    %v338 = vunpack.c.h.b16 %v145
    %v339 = vunpack.c.l.b16 %v146
    %v340 = vunpack.c.h.b16 %v146
    %v341 = vunpack.c.l.b16 %v147
    %v342 = vunpack.c.h.b16 %v147
    %v343 = vunpack.c.l.b16 %v148
    %v344 = vunpack.c.h.b16 %v148
    %v345 = vunpack.c.l.b16 %v149
    %v346 = vunpack.c.h.b16 %v149
    %v347 = vunpack.c.l.b16 %v150
    %v348 = vunpack.c.h.b16 %v150
    %v349 = vunpack.c.l.b16 %v151
    %v350 = vunpack.c.h.b16 %v151
    %v351 = vunpack.c.l.b16 %v152
    %v352 = vunpack.c.h.b16 %v152
    %v353 = vunpack.c.l.b16 %v153
    %v354 = vunpack.c.h.b16 %v153
    %v355 = vunpack.c.l.b16 %v154
    %v356 = vunpack.c.h.b16 %v154
    %v357 = vunpack.c.l.b16 %v155
    %v358 = vunpack.c.h.b16 %v155
    %v359 = vunpack.c.l.b16 %v156
    %v360 = vunpack.c.h.b16 %v156
    %v361 = vunpack.c.l.b16 %v157
    %v362 = vunpack.c.h.b16 %v157
    %v363 = vunpack.c.l.b16 %v158
    %v364 = vunpack.c.h.b16 %v158
    %v365 = vunpack.c.l.b16 %v159
    %v366 = vunpack.c.h.b16 %v159
    %v367 = vunpack.c.l.b16 %v160
    %v368 = vunpack.c.h.b16 %v160
    %v369 = vunpack.c.l.b16 %v161
    %v370 = vunpack.c.h.b16 %v161
    %v371 = vunpack.c.l.b16 %v162
    %v372 = vunpack.c.h.b16 %v162
    %v373 = vunpack.c.l.b16 %v163
    %v374 = vunpack.c.h.b16 %v163
    %v375 = vunpack.c.l.b16 %v164
    %v376 = vunpack.c.h.b16 %v164
    %v377 = vunpack.c.l.b16 %v165
    %v378 = vunpack.c.h.b16 %v165
    %v379 = vunpack.c.l.b16 %v166
    %v380 = vunpack.c.h.b16 %v166
    %v381 = vunpack.c.l.b16 %v167
    %v382 = vunpack.c.h.b16 %v167
    %v383 = vunpack.c.l.b16 %v168
    %v384 = vunpack.c.h.b16 %v168
    %v385 = vunpack.c.l.b16 %v169
    %v386 = vunpack.c.h.b16 %v169
    %v387 = vunpack.c.l.b16 %v170
    %v388 = vunpack.c.h.b16 %v170
    %v389 = vunpack.c.l.b16 %v171
    %v390 = vunpack.c.h.b16 %v171
    %v391 = vunpack.c.l.b16 %v172
    %v392 = vunpack.c.h.b16 %v172
    %v393 = vunpack.c.l.b16 %v173
    %v394 = vunpack.c.h.b16 %v173
    %v395 = vunpack.c.l.b16 %v174
    %v396 = vunpack.c.h.b16 %v174
    %v397 = vunpack.c.l.b16 %v175
    %v398 = vunpack.c.h.b16 %v175
    %v399 = vunpack.c.l.b16 %v176
    %v400 = vunpack.c.h.b16 %v176
    %v401 = vpack.c.b16 %v277, %v273
    %v402 = vpack.c.b16 %v278, %v274
    %v403 = vpack.c.b16 %v279, %v275
    %v404 = vpack.c.b16 %v280, %v276
    %v405 = vpack.c.b16 %v285, %v281
    %v406 = vpack.c.b16 %v286, %v282
    %v407 = vpack.c.b16 %v287, %v283
    %v408 = vpack.c.b16 %v288, %v284
    %v409 = vpack.c.b16 %v293, %v289
    %v410 = vpack.c.b16 %v294, %v290
    %v411 = vpack.c.b16 %v295, %v291
    %v412 = vpack.c.b16 %v296, %v292
    %v413 = vpack.c.b16 %v301, %v297
    %v414 = vpack.c.b16 %v302, %v298
    %v415 = vpack.c.b16 %v303, %v299
    %v416 = vpack.c.b16 %v304, %v300
    %v417 = vpack.c.b16 %v309, %v305
    %v418 = vpack.c.b16 %v310, %v306
    %v419 = vpack.c.b16 %v311, %v307
    %v420 = vpack.c.b16 %v312, %v308
    %v421 = vpack.c.b16 %v317, %v313
    %v422 = vpack.c.b16 %v318, %v314
    %v423 = vpack.c.b16 %v319, %v315
    %v424 = vpack.c.b16 %v320, %v316
    %v425 = vpack.c.b16 %v325, %v321
    %v426 = vpack.c.b16 %v326, %v322
    %v427 = vpack.c.b16 %v327, %v323
    %v428 = vpack.c.b16 %v328, %v324
    %v429 = vpack.c.b16 %v333, %v329
    %v430 = vpack.c.b16 %v334, %v330
    %v431 = vpack.c.b16 %v335, %v331
    %v432 = vpack.c.b16 %v336, %v332
    %v433 = vpack.c.b16 %v341, %v337
    %v434 = vpack.c.b16 %v342, %v338
    %v435 = vpack.c.b16 %v343, %v339
    %v436 = vpack.c.b16 %v344, %v340
    %v437 = vpack.c.b16 %v349, %v345
    %v438 = vpack.c.b16 %v350, %v346
    %v439 = vpack.c.b16 %v351, %v347
    %v440 = vpack.c.b16 %v352, %v348
    %v441 = vpack.c.b16 %v357, %v353
    %v442 = vpack.c.b16 %v358, %v354
    %v443 = vpack.c.b16 %v359, %v355
    %v444 = vpack.c.b16 %v360, %v356
    %v445 = vpack.c.b16 %v365, %v361
    %v446 = vpack.c.b16 %v366, %v362
    %v447 = vpack.c.b16 %v367, %v363
    %v448 = vpack.c.b16 %v368, %v364
    %v449 = vpack.c.b16 %v373, %v369
    %v450 = vpack.c.b16 %v374, %v370
    %v451 = vpack.c.b16 %v375, %v371
    %v452 = vpack.c.b16 %v376, %v372
    %v453 = vpack.c.b16 %v381, %v377
    %v454 = vpack.c.b16 %v382, %v378
    %v455 = vpack.c.b16 %v383, %v379
    %v456 = vpack.c.b16 %v384, %v380
    %v457 = vpack.c.b16 %v389, %v385
    %v458 = vpack.c.b16 %v390, %v386
    %v459 = vpack.c.b16 %v391, %v387
    %v460 = vpack.c.b16 %v392, %v388
    %v461 = vpack.c.b16 %v397, %v393
    %v462 = vpack.c.b16 %v398, %v394
    %v463 = vpack.c.b16 %v399, %v395
    %v464 = vpack.c.b16 %v400, %v396
    %529 = vmatprep.subr.bf16.mxu0 %v430
    %530 = vmatpush1.bf16.msra.mxu0 %v429
    %531 = vmatprep.subr.bf16.mxu0 %v426
    %532 = vmatpush1.bf16.msra.mxu0 %v425
    %533 = vmatprep.subr.bf16.mxu0 %v422
    %534 = vmatpush1.bf16.msra.mxu0 %v421
    %535 = vmatprep.subr.bf16.mxu0 %v418
    %536 = vmatpush1.bf16.msra.mxu0 %v417
    %537 = vmatprep.subr.bf16.mxu0 %v414
    %538 = vmatpush1.bf16.msra.mxu0 %v413
    %539 = vmatprep.subr.bf16.mxu0 %v410
    %540 = vmatpush1.bf16.msra.mxu0 %v409
    %541 = vmatprep.subr.bf16.mxu0 %v406
    %542 = vmatpush1.bf16.msra.mxu0 %v405
    %543 = vmatprep.subr.bf16.mxu0 %v402
    %544 = vmatpush1.bf16.msra.mxu0 %v401
    %545 = vmatprep.subr.bf16.mxu0 %v462
    %546 = vmatpush2.bf16.msra.mxu0 %v461
    %547 = vmatprep.subr.bf16.mxu0 %v458
    %548 = vmatpush2.bf16.msra.mxu0 %v457
    %549 = vmatprep.subr.bf16.mxu0 %v454
    %550 = vmatpush2.bf16.msra.mxu0 %v453
    %551 = vmatprep.subr.bf16.mxu0 %v450
    %552 = vmatpush2.bf16.msra.mxu0 %v449
    %553 = vmatprep.subr.bf16.mxu0 %v446
    %554 = vmatpush2.bf16.msra.mxu0 %v445
    %555 = vmatprep.subr.bf16.mxu0 %v442
    %556 = vmatpush2.bf16.msra.mxu0 %v441
    %557 = vmatprep.subr.bf16.mxu0 %v438
    %558 = vmatpush2.bf16.msra.mxu0 %v437
    %559 = vmatprep.subr.bf16.mxu0 %v434
    %560 = vmatpush2.bf16.msra.mxu0 %v433
    %561 = vmatprep.mubr.bf16.mxu0 %v206
    %562 = vmatmul.mubr.bf16.gmra.mxu0 %v205
    %v563 = vpop.f32.mrf.mxu0
    %v564 = vadd.f32 %v182, %v563
    %v565 = vpop.f32.mrf.mxu0
    %v566 = vadd.f32 %v186, %v565
    %v567 = vpop.f32.mrf.mxu0
    %v568 = vadd.f32 %v182, %v567
    %v569 = vpop.f32.mrf.mxu0
    %v570 = vadd.f32 %v186, %v569
    %571 = vdwg.mxu0
    %572 = vmatprep.subr.bf16.mxu0 %v432
    %573 = vmatpush1.bf16.msra.mxu0 %v431
    %574 = vmatprep.subr.bf16.mxu0 %v428
    %575 = vmatpush1.bf16.msra.mxu0 %v427
    %576 = vmatprep.subr.bf16.mxu0 %v424
    %577 = vmatpush1.bf16.msra.mxu0 %v423
    %578 = vmatprep.subr.bf16.mxu0 %v420
    %579 = vmatpush1.bf16.msra.mxu0 %v419
    %580 = vmatprep.subr.bf16.mxu0 %v416
    %581 = vmatpush1.bf16.msra.mxu0 %v415
    %582 = vmatprep.subr.bf16.mxu0 %v412
    %583 = vmatpush1.bf16.msra.mxu0 %v411
    %584 = vmatprep.subr.bf16.mxu0 %v408
    %585 = vmatpush1.bf16.msra.mxu0 %v407
    %586 = vmatprep.subr.bf16.mxu0 %v404
    %587 = vmatpush1.bf16.msra.mxu0 %v403
    %588 = vmatprep.subr.bf16.mxu0 %v464
    %589 = vmatpush2.bf16.msra.mxu0 %v463
    %590 = vmatprep.subr.bf16.mxu0 %v460
    %591 = vmatpush2.bf16.msra.mxu0 %v459
    %592 = vmatprep.subr.bf16.mxu0 %v456
    %593 = vmatpush2.bf16.msra.mxu0 %v455
    %594 = vmatprep.subr.bf16.mxu0 %v452
    %595 = vmatpush2.bf16.msra.mxu0 %v451
    %596 = vmatprep.subr.bf16.mxu0 %v448
    %597 = vmatpush2.bf16.msra.mxu0 %v447
    %598 = vmatprep.subr.bf16.mxu0 %v444
    %599 = vmatpush2.bf16.msra.mxu0 %v443
    %600 = vmatprep.subr.bf16.mxu0 %v440
    %601 = vmatpush2.bf16.msra.mxu0 %v439
    %602 = vmatprep.subr.bf16.mxu0 %v436
    %603 = vmatpush2.bf16.msra.mxu0 %v435
    %604 = vmatprep.mubr.bf16.mxu0 %v206
    %605 = vmatmul.mubr.bf16.gmra.mxu0 %v205
    %v606 = vpop.f32.mrf.mxu0
    %v607 = vadd.f32 %v190, %v606
    %v608 = vpop.f32.mrf.mxu0
    %v609 = vadd.f32 %v194, %v608
    %v610 = vpop.f32.mrf.mxu0
    %v611 = vadd.f32 %v190, %v610
    %v612 = vpop.f32.mrf.mxu0
    %v613 = vadd.f32 %v194, %v612
    %614 = vdwg.mxu0
    %v615 = vtanh.pop %v564
    %v616 = vtanh.pop %v566
    %v617 = vtanh.pop %v607
    %v618 = vtanh.pop %v609
    %v619 = vtanh.pop %v568
    %v620 = vtanh.pop %v570
    %v621 = vtanh.pop %v611
    %v622 = vtanh.pop %v613
    %v623 = vpack.c.bf16 %v619, %v615
    %v624 = vpack.c.bf16 %v620, %v616
    %v625 = vpack.c.bf16 %v621, %v617
    %v626 = vpack.c.bf16 %v622, %v618
    %v627 = vld [vmem:[#allocation8] sm:$0xff]
    %v628 = vld [vmem:[#allocation8 + $0x8] sm:$0xff]
    %v629 = vld [vmem:[#allocation8 + $0x10] sm:$0xff]
    %v630 = vld [vmem:[#allocation8 + $0x18] sm:$0xff]
    %v631 = vld [vmem:[#allocation8 + $0x20] sm:$0xff]
    %v632 = vld [vmem:[#allocation8 + $0x28] sm:$0xff]
    %v633 = vld [vmem:[#allocation8 + $0x30] sm:$0xff]
    %v634 = vld [vmem:[#allocation8 + $0x38] sm:$0xff]
    %v635 = vld [vmem:[#allocation8 + $0x40] sm:$0xff]
    %v636 = vld [vmem:[#allocation8 + $0x48] sm:$0xff]
    %v637 = vld [vmem:[#allocation8 + $0x50] sm:$0xff]
    %v638 = vld [vmem:[#allocation8 + $0x58] sm:$0xff]
    %v639 = vld [vmem:[#allocation8 + $0x60] sm:$0xff]
    %v640 = vld [vmem:[#allocation8 + $0x68] sm:$0xff]
    %v641 = vld [vmem:[#allocation8 + $0x70] sm:$0xff]
    %v642 = vld [vmem:[#allocation8 + $0x78] sm:$0xff]
    %v643 = vld [vmem:[#allocation8 + $0x80] sm:$0xff]
    %v644 = vld [vmem:[#allocation8 + $0x88] sm:$0xff]
    %v645 = vld [vmem:[#allocation8 + $0x90] sm:$0xff]
    %v646 = vld [vmem:[#allocation8 + $0x98] sm:$0xff]
    %v647 = vld [vmem:[#allocation8 + $0xa0] sm:$0xff]
    %v648 = vld [vmem:[#allocation8 + $0xa8] sm:$0xff]
    %v649 = vld [vmem:[#allocation8 + $0xb0] sm:$0xff]
    %v650 = vld [vmem:[#allocation8 + $0xb8] sm:$0xff]
    %v651 = vld [vmem:[#allocation8 + $0xc0] sm:$0xff]
    %v652 = vld [vmem:[#allocation8 + $0xc8] sm:$0xff]
    %v653 = vld [vmem:[#allocation8 + $0xd0] sm:$0xff]
    %v654 = vld [vmem:[#allocation8 + $0xd8] sm:$0xff]
    %v655 = vld [vmem:[#allocation8 + $0xe0] sm:$0xff]
    %v656 = vld [vmem:[#allocation8 + $0xe8] sm:$0xff]
    %v657 = vld [vmem:[#allocation8 + $0xf0] sm:$0xff]
    %v658 = vld [vmem:[#allocation8 + $0xf8] sm:$0xff]
    %v659 = vld [vmem:[#allocation8 + $0x100] sm:$0xff]
    %v660 = vld [vmem:[#allocation8 + $0x108] sm:$0xff]
    %v661 = vld [vmem:[#allocation8 + $0x110] sm:$0xff]
    %v662 = vld [vmem:[#allocation8 + $0x118] sm:$0xff]
    %v663 = vld [vmem:[#allocation8 + $0x120] sm:$0xff]
    %v664 = vld [vmem:[#allocation8 + $0x128] sm:$0xff]
    %v665 = vld [vmem:[#allocation8 + $0x130] sm:$0xff]
    %v666 = vld [vmem:[#allocation8 + $0x138] sm:$0xff]
    %v667 = vld [vmem:[#allocation8 + $0x140] sm:$0xff]
    %v668 = vld [vmem:[#allocation8 + $0x148] sm:$0xff]
    %v669 = vld [vmem:[#allocation8 + $0x150] sm:$0xff]
    %v670 = vld [vmem:[#allocation8 + $0x158] sm:$0xff]
    %v671 = vld [vmem:[#allocation8 + $0x160] sm:$0xff]
    %v672 = vld [vmem:[#allocation8 + $0x168] sm:$0xff]
    %v673 = vld [vmem:[#allocation8 + $0x170] sm:$0xff]
    %v674 = vld [vmem:[#allocation8 + $0x178] sm:$0xff]
    %v675 = vld [vmem:[#allocation8 + $0x180] sm:$0xff]
    %v676 = vld [vmem:[#allocation8 + $0x188] sm:$0xff]
    %v677 = vld [vmem:[#allocation8 + $0x190] sm:$0xff]
    %v678 = vld [vmem:[#allocation8 + $0x198] sm:$0xff]
    %v679 = vld [vmem:[#allocation8 + $0x1a0] sm:$0xff]
    %v680 = vld [vmem:[#allocation8 + $0x1a8] sm:$0xff]
    %v681 = vld [vmem:[#allocation8 + $0x1b0] sm:$0xff]
    %v682 = vld [vmem:[#allocation8 + $0x1b8] sm:$0xff]
    %v683 = vld [vmem:[#allocation8 + $0x1c0] sm:$0xff]
    %v684 = vld [vmem:[#allocation8 + $0x1c8] sm:$0xff]
    %v685 = vld [vmem:[#allocation8 + $0x1d0] sm:$0xff]
    %v686 = vld [vmem:[#allocation8 + $0x1d8] sm:$0xff]
    %v687 = vld [vmem:[#allocation8 + $0x1e0] sm:$0xff]
    %v688 = vld [vmem:[#allocation8 + $0x1e8] sm:$0xff]
    %v689 = vld [vmem:[#allocation8 + $0x1f0] sm:$0xff]
    %v690 = vld [vmem:[#allocation8 + $0x1f8] sm:$0xff]
    %v691 = vld [vmem:[#allocation8 + $0x200] sm:$0xff]
    %v692 = vld [vmem:[#allocation8 + $0x208] sm:$0xff]
    %v693 = vld [vmem:[#allocation8 + $0x210] sm:$0xff]
    %v694 = vld [vmem:[#allocation8 + $0x218] sm:$0xff]
    %v695 = vld [vmem:[#allocation8 + $0x220] sm:$0xff]
    %v696 = vld [vmem:[#allocation8 + $0x228] sm:$0xff]
    %v697 = vld [vmem:[#allocation8 + $0x230] sm:$0xff]
    %v698 = vld [vmem:[#allocation8 + $0x238] sm:$0xff]
    %v699 = vld [vmem:[#allocation8 + $0x240] sm:$0xff]
    %v700 = vld [vmem:[#allocation8 + $0x248] sm:$0xff]
    %v701 = vld [vmem:[#allocation8 + $0x250] sm:$0xff]
    %v702 = vld [vmem:[#allocation8 + $0x258] sm:$0xff]
    %v703 = vld [vmem:[#allocation8 + $0x260] sm:$0xff]
    %v704 = vld [vmem:[#allocation8 + $0x268] sm:$0xff]
    %v705 = vld [vmem:[#allocation8 + $0x270] sm:$0xff]
    %v706 = vld [vmem:[#allocation8 + $0x278] sm:$0xff]
    %v707 = vld [vmem:[#allocation8 + $0x280] sm:$0xff]
    %v708 = vld [vmem:[#allocation8 + $0x288] sm:$0xff]
    %v709 = vld [vmem:[#allocation8 + $0x290] sm:$0xff]
    %v710 = vld [vmem:[#allocation8 + $0x298] sm:$0xff]
    %v711 = vld [vmem:[#allocation8 + $0x2a0] sm:$0xff]
    %v712 = vld [vmem:[#allocation8 + $0x2a8] sm:$0xff]
    %v713 = vld [vmem:[#allocation8 + $0x2b0] sm:$0xff]
    %v714 = vld [vmem:[#allocation8 + $0x2b8] sm:$0xff]
    %v715 = vld [vmem:[#allocation8 + $0x2c0] sm:$0xff]
    %v716 = vld [vmem:[#allocation8 + $0x2c8] sm:$0xff]
    %v717 = vld [vmem:[#allocation8 + $0x2d0] sm:$0xff]
    %v718 = vld [vmem:[#allocation8 + $0x2d8] sm:$0xff]
    %v719 = vld [vmem:[#allocation8 + $0x2e0] sm:$0xff]
    %v720 = vld [vmem:[#allocation8 + $0x2e8] sm:$0xff]
    %v721 = vld [vmem:[#allocation8 + $0x2f0] sm:$0xff]
    %v722 = vld [vmem:[#allocation8 + $0x2f8] sm:$0xff]
    %v723 = vld [vmem:[#allocation8 + $0x300] sm:$0xff]
    %v724 = vld [vmem:[#allocation8 + $0x308] sm:$0xff]
    %v725 = vld [vmem:[#allocation8 + $0x310] sm:$0xff]
    %v726 = vld [vmem:[#allocation8 + $0x318] sm:$0xff]
    %v727 = vld [vmem:[#allocation8 + $0x320] sm:$0xff]
    %v728 = vld [vmem:[#allocation8 + $0x328] sm:$0xff]
    %v729 = vld [vmem:[#allocation8 + $0x330] sm:$0xff]
    %v730 = vld [vmem:[#allocation8 + $0x338] sm:$0xff]
    %v731 = vld [vmem:[#allocation8 + $0x340] sm:$0xff]
    %v732 = vld [vmem:[#allocation8 + $0x348] sm:$0xff]
    %v733 = vld [vmem:[#allocation8 + $0x350] sm:$0xff]
    %v734 = vld [vmem:[#allocation8 + $0x358] sm:$0xff]
    %v735 = vld [vmem:[#allocation8 + $0x360] sm:$0xff]
    %v736 = vld [vmem:[#allocation8 + $0x368] sm:$0xff]
    %v737 = vld [vmem:[#allocation8 + $0x370] sm:$0xff]
    %v738 = vld [vmem:[#allocation8 + $0x378] sm:$0xff]
    %v739 = vld [vmem:[#allocation8 + $0x380] sm:$0xff]
    %v740 = vld [vmem:[#allocation8 + $0x388] sm:$0xff]
    %v741 = vld [vmem:[#allocation8 + $0x390] sm:$0xff]
    %v742 = vld [vmem:[#allocation8 + $0x398] sm:$0xff]
    %v743 = vld [vmem:[#allocation8 + $0x3a0] sm:$0xff]
    %v744 = vld [vmem:[#allocation8 + $0x3a8] sm:$0xff]
    %v745 = vld [vmem:[#allocation8 + $0x3b0] sm:$0xff]
    %v746 = vld [vmem:[#allocation8 + $0x3b8] sm:$0xff]
    %v747 = vld [vmem:[#allocation8 + $0x3c0] sm:$0xff]
    %v748 = vld [vmem:[#allocation8 + $0x3c8] sm:$0xff]
    %v749 = vld [vmem:[#allocation8 + $0x3d0] sm:$0xff]
    %v750 = vld [vmem:[#allocation8 + $0x3d8] sm:$0xff]
    %v751 = vld [vmem:[#allocation8 + $0x3e0] sm:$0xff]
    %v752 = vld [vmem:[#allocation8 + $0x3e8] sm:$0xff]
    %v753 = vld [vmem:[#allocation8 + $0x3f0] sm:$0xff]
    %v754 = vld [vmem:[#allocation8 + $0x3f8] sm:$0xff]
    %v755 = vld [vmem:[%s4] sm:$0xf]
    %v757 = vlaneseq
    %v758 = vshrl.u32 %v757, 7
    %v759 = vsub.s32 0, %v758
    %v760 = vrot.slane %v755, %v759
    %v761 = vlaneseq
    %v762 = vshrl.u32 %v761, 7
    %v763 = vsub.s32 1, %v762
    %v764 = vrot.slane %v755, %v763
    %v765 = vlaneseq
    %v766 = vshrl.u32 %v765, 7
    %v767 = vsub.s32 2, %v766
    %v768 = vrot.slane %v755, %v767
    %v769 = vlaneseq
    %v770 = vshrl.u32 %v769, 7
    %v771 = vsub.s32 3, %v770
    %v772 = vrot.slane %v755, %v771
    %v905 = vunpack.c.l.b16 %v627
    %v906 = vunpack.c.h.b16 %v627
    %v907 = vunpack.c.l.b16 %v628
    %v908 = vunpack.c.h.b16 %v628
    %v909 = vunpack.c.l.b16 %v629
    %v910 = vunpack.c.h.b16 %v629
    %v911 = vunpack.c.l.b16 %v630
    %v912 = vunpack.c.h.b16 %v630
    %v913 = vunpack.c.l.b16 %v631
    %v914 = vunpack.c.h.b16 %v631
    %v915 = vunpack.c.l.b16 %v632
    %v916 = vunpack.c.h.b16 %v632
    %v917 = vunpack.c.l.b16 %v633
    %v918 = vunpack.c.h.b16 %v633
    %v919 = vunpack.c.l.b16 %v634
    %v920 = vunpack.c.h.b16 %v634
    %v921 = vunpack.c.l.b16 %v635
    %v922 = vunpack.c.h.b16 %v635
    %v923 = vunpack.c.l.b16 %v636
    %v924 = vunpack.c.h.b16 %v636
    %v925 = vunpack.c.l.b16 %v637
    %v926 = vunpack.c.h.b16 %v637
    %v927 = vunpack.c.l.b16 %v638
    %v928 = vunpack.c.h.b16 %v638
    %v929 = vunpack.c.l.b16 %v639
    %v930 = vunpack.c.h.b16 %v639
    %v931 = vunpack.c.l.b16 %v640
    %v932 = vunpack.c.h.b16 %v640
    %v933 = vunpack.c.l.b16 %v641
    %v934 = vunpack.c.h.b16 %v641
    %v935 = vunpack.c.l.b16 %v642
    %v936 = vunpack.c.h.b16 %v642
    %v937 = vunpack.c.l.b16 %v643
    %v938 = vunpack.c.h.b16 %v643
    %v939 = vunpack.c.l.b16 %v644
    %v940 = vunpack.c.h.b16 %v644
    %v941 = vunpack.c.l.b16 %v645
    %v942 = vunpack.c.h.b16 %v645
    %v943 = vunpack.c.l.b16 %v646
    %v944 = vunpack.c.h.b16 %v646
    %v945 = vunpack.c.l.b16 %v647
    %v946 = vunpack.c.h.b16 %v647
    %v947 = vunpack.c.l.b16 %v648
    %v948 = vunpack.c.h.b16 %v648
    %v949 = vunpack.c.l.b16 %v649
    %v950 = vunpack.c.h.b16 %v649
    %v951 = vunpack.c.l.b16 %v650
    %v952 = vunpack.c.h.b16 %v650
    %v953 = vunpack.c.l.b16 %v651
    %v954 = vunpack.c.h.b16 %v651
    %v955 = vunpack.c.l.b16 %v652
    %v956 = vunpack.c.h.b16 %v652
    %v957 = vunpack.c.l.b16 %v653
    %v958 = vunpack.c.h.b16 %v653
    %v959 = vunpack.c.l.b16 %v654
    %v960 = vunpack.c.h.b16 %v654
    %v961 = vunpack.c.l.b16 %v655
    %v962 = vunpack.c.h.b16 %v655
    %v963 = vunpack.c.l.b16 %v656
    %v964 = vunpack.c.h.b16 %v656
    %v965 = vunpack.c.l.b16 %v657
    %v966 = vunpack.c.h.b16 %v657
    %v967 = vunpack.c.l.b16 %v658
    %v968 = vunpack.c.h.b16 %v658
    %v969 = vunpack.c.l.b16 %v659
    %v970 = vunpack.c.h.b16 %v659
    %v971 = vunpack.c.l.b16 %v660
    %v972 = vunpack.c.h.b16 %v660
    %v973 = vunpack.c.l.b16 %v661
    %v974 = vunpack.c.h.b16 %v661
    %v975 = vunpack.c.l.b16 %v662
    %v976 = vunpack.c.h.b16 %v662
    %v977 = vunpack.c.l.b16 %v663
    %v978 = vunpack.c.h.b16 %v663
    %v979 = vunpack.c.l.b16 %v664
    %v980 = vunpack.c.h.b16 %v664
    %v981 = vunpack.c.l.b16 %v665
    %v982 = vunpack.c.h.b16 %v665
    %v983 = vunpack.c.l.b16 %v666
    %v984 = vunpack.c.h.b16 %v666
    %v985 = vunpack.c.l.b16 %v667
    %v986 = vunpack.c.h.b16 %v667
    %v987 = vunpack.c.l.b16 %v668
    %v988 = vunpack.c.h.b16 %v668
    %v989 = vunpack.c.l.b16 %v669
    %v990 = vunpack.c.h.b16 %v669
    %v991 = vunpack.c.l.b16 %v670
    %v992 = vunpack.c.h.b16 %v670
    %v993 = vunpack.c.l.b16 %v671
    %v994 = vunpack.c.h.b16 %v671
    %v995 = vunpack.c.l.b16 %v672
    %v996 = vunpack.c.h.b16 %v672
    %v997 = vunpack.c.l.b16 %v673
    %v998 = vunpack.c.h.b16 %v673
    %v999 = vunpack.c.l.b16 %v674
    %v1000 = vunpack.c.h.b16 %v674
    %v1001 = vunpack.c.l.b16 %v675
    %v1002 = vunpack.c.h.b16 %v675
    %v1003 = vunpack.c.l.b16 %v676
    %v1004 = vunpack.c.h.b16 %v676
    %v1005 = vunpack.c.l.b16 %v677
    %v1006 = vunpack.c.h.b16 %v677
    %v1007 = vunpack.c.l.b16 %v678
    %v1008 = vunpack.c.h.b16 %v678
    %v1009 = vunpack.c.l.b16 %v679
    %v1010 = vunpack.c.h.b16 %v679
    %v1011 = vunpack.c.l.b16 %v680
    %v1012 = vunpack.c.h.b16 %v680
    %v1013 = vunpack.c.l.b16 %v681
    %v1014 = vunpack.c.h.b16 %v681
    %v1015 = vunpack.c.l.b16 %v682
    %v1016 = vunpack.c.h.b16 %v682
    %v1017 = vunpack.c.l.b16 %v683
    %v1018 = vunpack.c.h.b16 %v683
    %v1019 = vunpack.c.l.b16 %v684
    %v1020 = vunpack.c.h.b16 %v684
    %v1021 = vunpack.c.l.b16 %v685
    %v1022 = vunpack.c.h.b16 %v685
    %v1023 = vunpack.c.l.b16 %v686
    %v1024 = vunpack.c.h.b16 %v686
    %v1025 = vunpack.c.l.b16 %v687
    %v1026 = vunpack.c.h.b16 %v687
    %v1027 = vunpack.c.l.b16 %v688
    %v1028 = vunpack.c.h.b16 %v688
    %v1029 = vunpack.c.l.b16 %v689
    %v1030 = vunpack.c.h.b16 %v689
    %v1031 = vunpack.c.l.b16 %v690
    %v1032 = vunpack.c.h.b16 %v690
    %v1033 = vunpack.c.l.b16 %v691
    %v1034 = vunpack.c.h.b16 %v691
    %v1035 = vunpack.c.l.b16 %v692
    %v1036 = vunpack.c.h.b16 %v692
    %v1037 = vunpack.c.l.b16 %v693
    %v1038 = vunpack.c.h.b16 %v693
    %v1039 = vunpack.c.l.b16 %v694
    %v1040 = vunpack.c.h.b16 %v694
    %v1041 = vunpack.c.l.b16 %v695
    %v1042 = vunpack.c.h.b16 %v695
    %v1043 = vunpack.c.l.b16 %v696
    %v1044 = vunpack.c.h.b16 %v696
    %v1045 = vunpack.c.l.b16 %v697
    %v1046 = vunpack.c.h.b16 %v697
    %v1047 = vunpack.c.l.b16 %v698
    %v1048 = vunpack.c.h.b16 %v698
    %v1049 = vunpack.c.l.b16 %v699
    %v1050 = vunpack.c.h.b16 %v699
    %v1051 = vunpack.c.l.b16 %v700
    %v1052 = vunpack.c.h.b16 %v700
    %v1053 = vunpack.c.l.b16 %v701
    %v1054 = vunpack.c.h.b16 %v701
    %v1055 = vunpack.c.l.b16 %v702
    %v1056 = vunpack.c.h.b16 %v702
    %v1057 = vunpack.c.l.b16 %v703
    %v1058 = vunpack.c.h.b16 %v703
    %v1059 = vunpack.c.l.b16 %v704
    %v1060 = vunpack.c.h.b16 %v704
    %v1061 = vunpack.c.l.b16 %v705
    %v1062 = vunpack.c.h.b16 %v705
    %v1063 = vunpack.c.l.b16 %v706
    %v1064 = vunpack.c.h.b16 %v706
    %v1065 = vunpack.c.l.b16 %v707
    %v1066 = vunpack.c.h.b16 %v707
    %v1067 = vunpack.c.l.b16 %v708
    %v1068 = vunpack.c.h.b16 %v708
    %v1069 = vunpack.c.l.b16 %v709
    %v1070 = vunpack.c.h.b16 %v709
    %v1071 = vunpack.c.l.b16 %v710
    %v1072 = vunpack.c.h.b16 %v710
    %v1073 = vunpack.c.l.b16 %v711
    %v1074 = vunpack.c.h.b16 %v711
    %v1075 = vunpack.c.l.b16 %v712
    %v1076 = vunpack.c.h.b16 %v712
    %v1077 = vunpack.c.l.b16 %v713
    %v1078 = vunpack.c.h.b16 %v713
    %v1079 = vunpack.c.l.b16 %v714
    %v1080 = vunpack.c.h.b16 %v714
    %v1081 = vunpack.c.l.b16 %v715
    %v1082 = vunpack.c.h.b16 %v715
    %v1083 = vunpack.c.l.b16 %v716
    %v1084 = vunpack.c.h.b16 %v716
    %v1085 = vunpack.c.l.b16 %v717
    %v1086 = vunpack.c.h.b16 %v717
    %v1087 = vunpack.c.l.b16 %v718
    %v1088 = vunpack.c.h.b16 %v718
    %v1089 = vunpack.c.l.b16 %v719
    %v1090 = vunpack.c.h.b16 %v719
    %v1091 = vunpack.c.l.b16 %v720
    %v1092 = vunpack.c.h.b16 %v720
    %v1093 = vunpack.c.l.b16 %v721
    %v1094 = vunpack.c.h.b16 %v721
    %v1095 = vunpack.c.l.b16 %v722
    %v1096 = vunpack.c.h.b16 %v722
    %v1097 = vunpack.c.l.b16 %v723
    %v1098 = vunpack.c.h.b16 %v723
    %v1099 = vunpack.c.l.b16 %v724
    %v1100 = vunpack.c.h.b16 %v724
    %v1101 = vunpack.c.l.b16 %v725
    %v1102 = vunpack.c.h.b16 %v725
    %v1103 = vunpack.c.l.b16 %v726
    %v1104 = vunpack.c.h.b16 %v726
    %v1105 = vunpack.c.l.b16 %v727
    %v1106 = vunpack.c.h.b16 %v727
    %v1107 = vunpack.c.l.b16 %v728
    %v1108 = vunpack.c.h.b16 %v728
    %v1109 = vunpack.c.l.b16 %v729
    %v1110 = vunpack.c.h.b16 %v729
    %v1111 = vunpack.c.l.b16 %v730
    %v1112 = vunpack.c.h.b16 %v730
    %v1113 = vunpack.c.l.b16 %v731
    %v1114 = vunpack.c.h.b16 %v731
    %v1115 = vunpack.c.l.b16 %v732
    %v1116 = vunpack.c.h.b16 %v732
    %v1117 = vunpack.c.l.b16 %v733
    %v1118 = vunpack.c.h.b16 %v733
    %v1119 = vunpack.c.l.b16 %v734
    %v1120 = vunpack.c.h.b16 %v734
    %v1121 = vunpack.c.l.b16 %v735
    %v1122 = vunpack.c.h.b16 %v735
    %v1123 = vunpack.c.l.b16 %v736
    %v1124 = vunpack.c.h.b16 %v736
    %v1125 = vunpack.c.l.b16 %v737
    %v1126 = vunpack.c.h.b16 %v737
    %v1127 = vunpack.c.l.b16 %v738
    %v1128 = vunpack.c.h.b16 %v738
    %v1129 = vunpack.c.l.b16 %v739
    %v1130 = vunpack.c.h.b16 %v739
    %v1131 = vunpack.c.l.b16 %v740
    %v1132 = vunpack.c.h.b16 %v740
    %v1133 = vunpack.c.l.b16 %v741
    %v1134 = vunpack.c.h.b16 %v741
    %v1135 = vunpack.c.l.b16 %v742
    %v1136 = vunpack.c.h.b16 %v742
    %v1137 = vunpack.c.l.b16 %v743
    %v1138 = vunpack.c.h.b16 %v743
    %v1139 = vunpack.c.l.b16 %v744
    %v1140 = vunpack.c.h.b16 %v744
    %v1141 = vunpack.c.l.b16 %v745
    %v1142 = vunpack.c.h.b16 %v745
    %v1143 = vunpack.c.l.b16 %v746
    %v1144 = vunpack.c.h.b16 %v746
    %v1145 = vunpack.c.l.b16 %v747
    %v1146 = vunpack.c.h.b16 %v747
    %v1147 = vunpack.c.l.b16 %v748
    %v1148 = vunpack.c.h.b16 %v748
    %v1149 = vunpack.c.l.b16 %v749
    %v1150 = vunpack.c.h.b16 %v749
    %v1151 = vunpack.c.l.b16 %v750
    %v1152 = vunpack.c.h.b16 %v750
    %v1153 = vunpack.c.l.b16 %v751
    %v1154 = vunpack.c.h.b16 %v751
    %v1155 = vunpack.c.l.b16 %v752
    %v1156 = vunpack.c.h.b16 %v752
    %v1157 = vunpack.c.l.b16 %v753
    %v1158 = vunpack.c.h.b16 %v753
    %v1159 = vunpack.c.l.b16 %v754
    %v1160 = vunpack.c.h.b16 %v754
    %v1161 = vpack.c.b16 %v909, %v905
    %v1162 = vpack.c.b16 %v910, %v906
    %v1163 = vpack.c.b16 %v911, %v907
    %v1164 = vpack.c.b16 %v912, %v908
    %v1165 = vpack.c.b16 %v917, %v913
    %v1166 = vpack.c.b16 %v918, %v914
    %v1167 = vpack.c.b16 %v919, %v915
    %v1168 = vpack.c.b16 %v920, %v916
    %v1169 = vpack.c.b16 %v925, %v921
    %v1170 = vpack.c.b16 %v926, %v922
    %v1171 = vpack.c.b16 %v927, %v923
    %v1172 = vpack.c.b16 %v928, %v924
    %v1173 = vpack.c.b16 %v933, %v929
    %v1174 = vpack.c.b16 %v934, %v930
    %v1175 = vpack.c.b16 %v935, %v931
    %v1176 = vpack.c.b16 %v936, %v932
    %v1177 = vpack.c.b16 %v941, %v937
    %v1178 = vpack.c.b16 %v942, %v938
    %v1179 = vpack.c.b16 %v943, %v939
    %v1180 = vpack.c.b16 %v944, %v940
    %v1181 = vpack.c.b16 %v949, %v945
    %v1182 = vpack.c.b16 %v950, %v946
    %v1183 = vpack.c.b16 %v951, %v947
    %v1184 = vpack.c.b16 %v952, %v948
    %v1185 = vpack.c.b16 %v957, %v953
    %v1186 = vpack.c.b16 %v958, %v954
    %v1187 = vpack.c.b16 %v959, %v955
    %v1188 = vpack.c.b16 %v960, %v956
    %v1189 = vpack.c.b16 %v965, %v961
    %v1190 = vpack.c.b16 %v966, %v962
    %v1191 = vpack.c.b16 %v967, %v963
    %v1192 = vpack.c.b16 %v968, %v964
    %v1193 = vpack.c.b16 %v973, %v969
    %v1194 = vpack.c.b16 %v974, %v970
    %v1195 = vpack.c.b16 %v975, %v971
    %v1196 = vpack.c.b16 %v976, %v972
    %v1197 = vpack.c.b16 %v981, %v977
    %v1198 = vpack.c.b16 %v982, %v978
    %v1199 = vpack.c.b16 %v983, %v979
    %v1200 = vpack.c.b16 %v984, %v980
    %v1201 = vpack.c.b16 %v989, %v985
    %v1202 = vpack.c.b16 %v990, %v986
    %v1203 = vpack.c.b16 %v991, %v987
    %v1204 = vpack.c.b16 %v992, %v988
    %v1205 = vpack.c.b16 %v997, %v993
    %v1206 = vpack.c.b16 %v998, %v994
    %v1207 = vpack.c.b16 %v999, %v995
    %v1208 = vpack.c.b16 %v1000, %v996
    %v1209 = vpack.c.b16 %v1005, %v1001
    %v1210 = vpack.c.b16 %v1006, %v1002
    %v1211 = vpack.c.b16 %v1007, %v1003
    %v1212 = vpack.c.b16 %v1008, %v1004
    %v1213 = vpack.c.b16 %v1013, %v1009
    %v1214 = vpack.c.b16 %v1014, %v1010
    %v1215 = vpack.c.b16 %v1015, %v1011
    %v1216 = vpack.c.b16 %v1016, %v1012
    %v1217 = vpack.c.b16 %v1021, %v1017
    %v1218 = vpack.c.b16 %v1022, %v1018
    %v1219 = vpack.c.b16 %v1023, %v1019
    %v1220 = vpack.c.b16 %v1024, %v1020
    %v1221 = vpack.c.b16 %v1029, %v1025
    %v1222 = vpack.c.b16 %v1030, %v1026
    %v1223 = vpack.c.b16 %v1031, %v1027
    %v1224 = vpack.c.b16 %v1032, %v1028
    %v1225 = vpack.c.b16 %v1037, %v1033
    %v1226 = vpack.c.b16 %v1038, %v1034
    %v1227 = vpack.c.b16 %v1039, %v1035
    %v1228 = vpack.c.b16 %v1040, %v1036
    %v1229 = vpack.c.b16 %v1045, %v1041
    %v1230 = vpack.c.b16 %v1046, %v1042
    %v1231 = vpack.c.b16 %v1047, %v1043
    %v1232 = vpack.c.b16 %v1048, %v1044
    %v1233 = vpack.c.b16 %v1053, %v1049
    %v1234 = vpack.c.b16 %v1054, %v1050
    %v1235 = vpack.c.b16 %v1055, %v1051
    %v1236 = vpack.c.b16 %v1056, %v1052
    %v1237 = vpack.c.b16 %v1061, %v1057
    %v1238 = vpack.c.b16 %v1062, %v1058
    %v1239 = vpack.c.b16 %v1063, %v1059
    %v1240 = vpack.c.b16 %v1064, %v1060
    %v1241 = vpack.c.b16 %v1069, %v1065
    %v1242 = vpack.c.b16 %v1070, %v1066
    %v1243 = vpack.c.b16 %v1071, %v1067
    %v1244 = vpack.c.b16 %v1072, %v1068
    %v1245 = vpack.c.b16 %v1077, %v1073
    %v1246 = vpack.c.b16 %v1078, %v1074
    %v1247 = vpack.c.b16 %v1079, %v1075
    %v1248 = vpack.c.b16 %v1080, %v1076
    %v1249 = vpack.c.b16 %v1085, %v1081
    %v1250 = vpack.c.b16 %v1086, %v1082
    %v1251 = vpack.c.b16 %v1087, %v1083
    %v1252 = vpack.c.b16 %v1088, %v1084
    %v1253 = vpack.c.b16 %v1093, %v1089
    %v1254 = vpack.c.b16 %v1094, %v1090
    %v1255 = vpack.c.b16 %v1095, %v1091
    %v1256 = vpack.c.b16 %v1096, %v1092
    %v1257 = vpack.c.b16 %v1101, %v1097
    %v1258 = vpack.c.b16 %v1102, %v1098
    %v1259 = vpack.c.b16 %v1103, %v1099
    %v1260 = vpack.c.b16 %v1104, %v1100
    %v1261 = vpack.c.b16 %v1109, %v1105
    %v1262 = vpack.c.b16 %v1110, %v1106
    %v1263 = vpack.c.b16 %v1111, %v1107
    %v1264 = vpack.c.b16 %v1112, %v1108
    %v1265 = vpack.c.b16 %v1117, %v1113
    %v1266 = vpack.c.b16 %v1118, %v1114
    %v1267 = vpack.c.b16 %v1119, %v1115
    %v1268 = vpack.c.b16 %v1120, %v1116
    %v1269 = vpack.c.b16 %v1125, %v1121
    %v1270 = vpack.c.b16 %v1126, %v1122
    %v1271 = vpack.c.b16 %v1127, %v1123
    %v1272 = vpack.c.b16 %v1128, %v1124
    %v1273 = vpack.c.b16 %v1133, %v1129
    %v1274 = vpack.c.b16 %v1134, %v1130
    %v1275 = vpack.c.b16 %v1135, %v1131
    %v1276 = vpack.c.b16 %v1136, %v1132
    %v1277 = vpack.c.b16 %v1141, %v1137
    %v1278 = vpack.c.b16 %v1142, %v1138
    %v1279 = vpack.c.b16 %v1143, %v1139
    %v1280 = vpack.c.b16 %v1144, %v1140
    %v1281 = vpack.c.b16 %v1149, %v1145
    %v1282 = vpack.c.b16 %v1150, %v1146
    %v1283 = vpack.c.b16 %v1151, %v1147
    %v1284 = vpack.c.b16 %v1152, %v1148
    %v1285 = vpack.c.b16 %v1157, %v1153
    %v1286 = vpack.c.b16 %v1158, %v1154
    %v1287 = vpack.c.b16 %v1159, %v1155
    %v1288 = vpack.c.b16 %v1160, %v1156
    %1417 = vmatprep.subr.bf16.mxu0 %v1190
    %1418 = vmatpush1.bf16.msra.mxu0 %v1189
    %1419 = vmatprep.subr.bf16.mxu0 %v1186
    %1420 = vmatpush1.bf16.msra.mxu0 %v1185
    %1421 = vmatprep.subr.bf16.mxu0 %v1182
    %1422 = vmatpush1.bf16.msra.mxu0 %v1181
    %1423 = vmatprep.subr.bf16.mxu0 %v1178
    %1424 = vmatpush1.bf16.msra.mxu0 %v1177
    %1425 = vmatprep.subr.bf16.mxu0 %v1174
    %1426 = vmatpush1.bf16.msra.mxu0 %v1173
    %1427 = vmatprep.subr.bf16.mxu0 %v1170
    %1428 = vmatpush1.bf16.msra.mxu0 %v1169
    %1429 = vmatprep.subr.bf16.mxu0 %v1166
    %1430 = vmatpush1.bf16.msra.mxu0 %v1165
    %1431 = vmatprep.subr.bf16.mxu0 %v1162
    %1432 = vmatpush1.bf16.msra.mxu0 %v1161
    %1433 = vmatprep.subr.bf16.mxu0 %v1222
    %1434 = vmatpush2.bf16.msra.mxu0 %v1221
    %1435 = vmatprep.subr.bf16.mxu0 %v1218
    %1436 = vmatpush2.bf16.msra.mxu0 %v1217
    %1437 = vmatprep.subr.bf16.mxu0 %v1214
    %1438 = vmatpush2.bf16.msra.mxu0 %v1213
    %1439 = vmatprep.subr.bf16.mxu0 %v1210
    %1440 = vmatpush2.bf16.msra.mxu0 %v1209
    %1441 = vmatprep.subr.bf16.mxu0 %v1206
    %1442 = vmatpush2.bf16.msra.mxu0 %v1205
    %1443 = vmatprep.subr.bf16.mxu0 %v1202
    %1444 = vmatpush2.bf16.msra.mxu0 %v1201
    %1445 = vmatprep.subr.bf16.mxu0 %v1198
    %1446 = vmatpush2.bf16.msra.mxu0 %v1197
    %1447 = vmatprep.subr.bf16.mxu0 %v1194
    %1448 = vmatpush2.bf16.msra.mxu0 %v1193
    %1449 = vmatprep.mubr.bf16.mxu0 %v624
    %1450 = vmatmul.mubr.bf16.gmra.mxu0 %v623
    %v1451 = vpop.f32.mrf.mxu0
    %v1452 = vadd.f32 %v760, %v1451
    %v1453 = vpop.f32.mrf.mxu0
    %v1454 = vadd.f32 %v764, %v1453
    %v1455 = vpop.f32.mrf.mxu0
    %v1456 = vadd.f32 %v760, %v1455
    %v1457 = vpop.f32.mrf.mxu0
    %v1458 = vadd.f32 %v764, %v1457
    %1459 = vdwg.mxu0
    %1460 = vmatprep.subr.bf16.mxu0 %v1254
    %1461 = vmatpush1.bf16.msra.mxu0 %v1253
    %1462 = vmatprep.subr.bf16.mxu0 %v1250
    %1463 = vmatpush1.bf16.msra.mxu0 %v1249
    %1464 = vmatprep.subr.bf16.mxu0 %v1246
    %1465 = vmatpush1.bf16.msra.mxu0 %v1245
    %1466 = vmatprep.subr.bf16.mxu0 %v1242
    %1467 = vmatpush1.bf16.msra.mxu0 %v1241
    %1468 = vmatprep.subr.bf16.mxu0 %v1238
    %1469 = vmatpush1.bf16.msra.mxu0 %v1237
    %1470 = vmatprep.subr.bf16.mxu0 %v1234
    %1471 = vmatpush1.bf16.msra.mxu0 %v1233
    %1472 = vmatprep.subr.bf16.mxu0 %v1230
    %1473 = vmatpush1.bf16.msra.mxu0 %v1229
    %1474 = vmatprep.subr.bf16.mxu0 %v1226
    %1475 = vmatpush1.bf16.msra.mxu0 %v1225
    %1476 = vmatprep.subr.bf16.mxu0 %v1286
    %1477 = vmatpush2.bf16.msra.mxu0 %v1285
    %1478 = vmatprep.subr.bf16.mxu0 %v1282
    %1479 = vmatpush2.bf16.msra.mxu0 %v1281
    %1480 = vmatprep.subr.bf16.mxu0 %v1278
    %1481 = vmatpush2.bf16.msra.mxu0 %v1277
    %1482 = vmatprep.subr.bf16.mxu0 %v1274
    %1483 = vmatpush2.bf16.msra.mxu0 %v1273
    %1484 = vmatprep.subr.bf16.mxu0 %v1270
    %1485 = vmatpush2.bf16.msra.mxu0 %v1269
    %1486 = vmatprep.subr.bf16.mxu0 %v1266
    %1487 = vmatpush2.bf16.msra.mxu0 %v1265
    %1488 = vmatprep.subr.bf16.mxu0 %v1262
    %1489 = vmatpush2.bf16.msra.mxu0 %v1261
    %1490 = vmatprep.subr.bf16.mxu0 %v1258
    %1491 = vmatpush2.bf16.msra.mxu0 %v1257
    %1492 = vmatprep.mubr.bf16.mxu0 %v626
    %1493 = vmatmul.mubr.bf16.gmra.mxu0 %v625
    %v1494 = vpop.f32.mrf.mxu0
    %v1495 = vadd.f32 %v1452, %v1494
    %v1496 = vpop.f32.mrf.mxu0
    %v1497 = vadd.f32 %v1454, %v1496
    %v1498 = vpop.f32.mrf.mxu0
    %v1499 = vadd.f32 %v1456, %v1498
    %v1500 = vpop.f32.mrf.mxu0
    %v1501 = vadd.f32 %v1458, %v1500
    %1502 = vdwg.mxu0
    %1503 = vmatprep.subr.bf16.mxu0 %v1192
    %1504 = vmatpush1.bf16.msra.mxu0 %v1191
    %1505 = vmatprep.subr.bf16.mxu0 %v1188
    %1506 = vmatpush1.bf16.msra.mxu0 %v1187
    %1507 = vmatprep.subr.bf16.mxu0 %v1184
    %1508 = vmatpush1.bf16.msra.mxu0 %v1183
    %1509 = vmatprep.subr.bf16.mxu0 %v1180
    %1510 = vmatpush1.bf16.msra.mxu0 %v1179
    %1511 = vmatprep.subr.bf16.mxu0 %v1176
    %1512 = vmatpush1.bf16.msra.mxu0 %v1175
    %1513 = vmatprep.subr.bf16.mxu0 %v1172
    %1514 = vmatpush1.bf16.msra.mxu0 %v1171
    %1515 = vmatprep.subr.bf16.mxu0 %v1168
    %1516 = vmatpush1.bf16.msra.mxu0 %v1167
    %1517 = vmatprep.subr.bf16.mxu0 %v1164
    %1518 = vmatpush1.bf16.msra.mxu0 %v1163
    %1519 = vmatprep.subr.bf16.mxu0 %v1224
    %1520 = vmatpush2.bf16.msra.mxu0 %v1223
    %1521 = vmatprep.subr.bf16.mxu0 %v1220
    %1522 = vmatpush2.bf16.msra.mxu0 %v1219
    %1523 = vmatprep.subr.bf16.mxu0 %v1216
    %1524 = vmatpush2.bf16.msra.mxu0 %v1215
    %1525 = vmatprep.subr.bf16.mxu0 %v1212
    %1526 = vmatpush2.bf16.msra.mxu0 %v1211
    %1527 = vmatprep.subr.bf16.mxu0 %v1208
    %1528 = vmatpush2.bf16.msra.mxu0 %v1207
    %1529 = vmatprep.subr.bf16.mxu0 %v1204
    %1530 = vmatpush2.bf16.msra.mxu0 %v1203
    %1531 = vmatprep.subr.bf16.mxu0 %v1200
    %1532 = vmatpush2.bf16.msra.mxu0 %v1199
    %1533 = vmatprep.subr.bf16.mxu0 %v1196
    %1534 = vmatpush2.bf16.msra.mxu0 %v1195
    %1535 = vmatprep.mubr.bf16.mxu0 %v624
    %1536 = vmatmul.mubr.bf16.gmra.mxu0 %v623
    %v1537 = vpop.f32.mrf.mxu0
    %v1538 = vadd.f32 %v768, %v1537
    %v1539 = vpop.f32.mrf.mxu0
    %v1540 = vadd.f32 %v772, %v1539
    %v1541 = vpop.f32.mrf.mxu0
    %v1542 = vadd.f32 %v768, %v1541
    %v1543 = vpop.f32.mrf.mxu0
    %v1544 = vadd.f32 %v772, %v1543
    %1545 = vdwg.mxu0
    %1546 = vmatprep.subr.bf16.mxu0 %v1256
    %1547 = vmatpush1.bf16.msra.mxu0 %v1255
    %1548 = vmatprep.subr.bf16.mxu0 %v1252
    %1549 = vmatpush1.bf16.msra.mxu0 %v1251
    %1550 = vmatprep.subr.bf16.mxu0 %v1248
    %1551 = vmatpush1.bf16.msra.mxu0 %v1247
    %1552 = vmatprep.subr.bf16.mxu0 %v1244
    %1553 = vmatpush1.bf16.msra.mxu0 %v1243
    %1554 = vmatprep.subr.bf16.mxu0 %v1240
    %1555 = vmatpush1.bf16.msra.mxu0 %v1239
    %1556 = vmatprep.subr.bf16.mxu0 %v1236
    %1557 = vmatpush1.bf16.msra.mxu0 %v1235
    %1558 = vmatprep.subr.bf16.mxu0 %v1232
    %1559 = vmatpush1.bf16.msra.mxu0 %v1231
    %1560 = vmatprep.subr.bf16.mxu0 %v1228
    %1561 = vmatpush1.bf16.msra.mxu0 %v1227
    %1562 = vmatprep.subr.bf16.mxu0 %v1288
    %1563 = vmatpush2.bf16.msra.mxu0 %v1287
    %1564 = vmatprep.subr.bf16.mxu0 %v1284
    %1565 = vmatpush2.bf16.msra.mxu0 %v1283
    %1566 = vmatprep.subr.bf16.mxu0 %v1280
    %1567 = vmatpush2.bf16.msra.mxu0 %v1279
    %1568 = vmatprep.subr.bf16.mxu0 %v1276
    %1569 = vmatpush2.bf16.msra.mxu0 %v1275
    %1570 = vmatprep.subr.bf16.mxu0 %v1272
    %1571 = vmatpush2.bf16.msra.mxu0 %v1271
    %1572 = vmatprep.subr.bf16.mxu0 %v1268
    %1573 = vmatpush2.bf16.msra.mxu0 %v1267
    %1574 = vmatprep.subr.bf16.mxu0 %v1264
    %1575 = vmatpush2.bf16.msra.mxu0 %v1263
    %1576 = vmatprep.subr.bf16.mxu0 %v1260
    %1577 = vmatpush2.bf16.msra.mxu0 %v1259
    %1578 = vmatprep.mubr.bf16.mxu0 %v626
    %1579 = vmatmul.mubr.bf16.gmra.mxu0 %v625
    %v1580 = vpop.f32.mrf.mxu0
    %v1581 = vadd.f32 %v1538, %v1580
    %v1582 = vpop.f32.mrf.mxu0
    %v1583 = vadd.f32 %v1540, %v1582
    %v1584 = vpop.f32.mrf.mxu0
    %v1585 = vadd.f32 %v1542, %v1584
    %v1586 = vpop.f32.mrf.mxu0
    %v1587 = vadd.f32 %v1544, %v1586
    %1588 = vdwg.mxu0
    %v1589 = vtanh.pop %v1495
    %v1590 = vtanh.pop %v1497
    %v1591 = vtanh.pop %v1581
    %v1592 = vtanh.pop %v1583
    %v1593 = vtanh.pop %v1499
    %v1594 = vtanh.pop %v1501
    %v1595 = vtanh.pop %v1585
    %v1596 = vtanh.pop %v1587
    %v1597 = vpack.c.bf16 %v1593, %v1589
    %v1598 = vpack.c.bf16 %v1594, %v1590
    %v1599 = vpack.c.bf16 %v1595, %v1591
    %v1600 = vpack.c.bf16 %v1596, %v1592
    %v1601 = vld [vmem:[#allocation10] sm:$0xf]
    %v1602 = vld [vmem:[#allocation10 + $0x4] sm:$0xf]
    %v1603 = vld [vmem:[#allocation10 + $0x8] sm:$0xf]
    %v1604 = vld [vmem:[#allocation10 + $0xc] sm:$0xf]
    %v1605 = vld [vmem:[#allocation10 + $0x10] sm:$0xf]
    %v1606 = vld [vmem:[#allocation10 + $0x14] sm:$0xf]
    %v1607 = vld [vmem:[#allocation10 + $0x18] sm:$0xf]
    %v1608 = vld [vmem:[#allocation10 + $0x1c] sm:$0xf]
    %v1609 = vld [vmem:[#allocation10 + $0x20] sm:$0xf]
    %v1610 = vld [vmem:[#allocation10 + $0x24] sm:$0xf]
    %v1611 = vld [vmem:[#allocation10 + $0x28] sm:$0xf]
    %v1612 = vld [vmem:[#allocation10 + $0x2c] sm:$0xf]
    %v1613 = vld [vmem:[#allocation10 + $0x30] sm:$0xf]
    %v1614 = vld [vmem:[#allocation10 + $0x34] sm:$0xf]
    %v1615 = vld [vmem:[#allocation10 + $0x38] sm:$0xf]
    %v1616 = vld [vmem:[#allocation10 + $0x3c] sm:$0xf]
    %v1617 = vld [vmem:[#allocation10 + $0x40] sm:$0xf]
    %v1618 = vld [vmem:[#allocation10 + $0x44] sm:$0xf]
    %v1619 = vld [vmem:[#allocation10 + $0x48] sm:$0xf]
    %v1620 = vld [vmem:[#allocation10 + $0x4c] sm:$0xf]
    %v1621 = vld [vmem:[#allocation10 + $0x50] sm:$0xf]
    %v1622 = vld [vmem:[#allocation10 + $0x54] sm:$0xf]
    %v1623 = vld [vmem:[#allocation10 + $0x58] sm:$0xf]
    %v1624 = vld [vmem:[#allocation10 + $0x5c] sm:$0xf]
    %v1625 = vld [vmem:[#allocation10 + $0x60] sm:$0xf]
    %v1626 = vld [vmem:[#allocation10 + $0x64] sm:$0xf]
    %v1627 = vld [vmem:[#allocation10 + $0x68] sm:$0xf]
    %v1628 = vld [vmem:[#allocation10 + $0x6c] sm:$0xf]
    %v1629 = vld [vmem:[#allocation10 + $0x70] sm:$0xf]
    %v1630 = vld [vmem:[#allocation10 + $0x74] sm:$0xf]
    %v1631 = vld [vmem:[#allocation10 + $0x78] sm:$0xf]
    %v1632 = vld [vmem:[#allocation10 + $0x7c] sm:$0xf]
    %v1633 = vld [vmem:[#allocation10 + $0x80] sm:$0xf]
    %v1634 = vld [vmem:[#allocation10 + $0x84] sm:$0xf]
    %v1635 = vld [vmem:[#allocation10 + $0x88] sm:$0xf]
    %v1636 = vld [vmem:[#allocation10 + $0x8c] sm:$0xf]
    %v1637 = vld [vmem:[#allocation10 + $0x90] sm:$0xf]
    %v1638 = vld [vmem:[#allocation10 + $0x94] sm:$0xf]
    %v1639 = vld [vmem:[#allocation10 + $0x98] sm:$0xf]
    %v1640 = vld [vmem:[#allocation10 + $0x9c] sm:$0xf]
    %v1641 = vld [vmem:[#allocation10 + $0xa0] sm:$0xf]
    %v1642 = vld [vmem:[#allocation10 + $0xa4] sm:$0xf]
    %v1643 = vld [vmem:[#allocation10 + $0xa8] sm:$0xf]
    %v1644 = vld [vmem:[#allocation10 + $0xac] sm:$0xf]
    %v1645 = vld [vmem:[#allocation10 + $0xb0] sm:$0xf]
    %v1646 = vld [vmem:[#allocation10 + $0xb4] sm:$0xf]
    %v1647 = vld [vmem:[#allocation10 + $0xb8] sm:$0xf]
    %v1648 = vld [vmem:[#allocation10 + $0xbc] sm:$0xf]
    %v1649 = vld [vmem:[#allocation10 + $0xc0] sm:$0xf]
    %v1650 = vld [vmem:[#allocation10 + $0xc4] sm:$0xf]
    %v1651 = vld [vmem:[#allocation10 + $0xc8] sm:$0xf]
    %v1652 = vld [vmem:[#allocation10 + $0xcc] sm:$0xf]
    %v1653 = vld [vmem:[#allocation10 + $0xd0] sm:$0xf]
    %v1654 = vld [vmem:[#allocation10 + $0xd4] sm:$0xf]
    %v1655 = vld [vmem:[#allocation10 + $0xd8] sm:$0xf]
    %v1656 = vld [vmem:[#allocation10 + $0xdc] sm:$0xf]
    %v1657 = vld [vmem:[#allocation10 + $0xe0] sm:$0xf]
    %v1658 = vld [vmem:[#allocation10 + $0xe4] sm:$0xf]
    %v1659 = vld [vmem:[#allocation10 + $0xe8] sm:$0xf]
    %v1660 = vld [vmem:[#allocation10 + $0xec] sm:$0xf]
    %v1661 = vld [vmem:[#allocation10 + $0xf0] sm:$0xf]
    %v1662 = vld [vmem:[#allocation10 + $0xf4] sm:$0xf]
    %v1663 = vld [vmem:[#allocation10 + $0xf8] sm:$0xf]
    %v1664 = vld [vmem:[#allocation10 + $0xfc] sm:$0xf]
    %v1665 = vld [vmem:[%s6] sm:$0x1]
    %v1667 = vlaneseq
    %v1668 = vshrl.u32 %v1667, 7
    %v1669 = vsub.s32 0, %v1668
    %v1670 = vrot.slane %v1665, %v1669
    %v1736 = vunpack.c.l.b16 %v1601
    %v1737 = vunpack.c.l.b16 %v1602
    %v1738 = vunpack.c.l.b16 %v1603
    %v1739 = vunpack.c.l.b16 %v1604
    %v1740 = vunpack.c.l.b16 %v1605
    %v1741 = vunpack.c.l.b16 %v1606
    %v1742 = vunpack.c.l.b16 %v1607
    %v1743 = vunpack.c.l.b16 %v1608
    %v1744 = vunpack.c.l.b16 %v1609
    %v1745 = vunpack.c.l.b16 %v1610
    %v1746 = vunpack.c.l.b16 %v1611
    %v1747 = vunpack.c.l.b16 %v1612
    %v1748 = vunpack.c.l.b16 %v1613
    %v1749 = vunpack.c.l.b16 %v1614
    %v1750 = vunpack.c.l.b16 %v1615
    %v1751 = vunpack.c.l.b16 %v1616
    %v1752 = vunpack.c.l.b16 %v1617
    %v1753 = vunpack.c.l.b16 %v1618
    %v1754 = vunpack.c.l.b16 %v1619
    %v1755 = vunpack.c.l.b16 %v1620
    %v1756 = vunpack.c.l.b16 %v1621
    %v1757 = vunpack.c.l.b16 %v1622
    %v1758 = vunpack.c.l.b16 %v1623
    %v1759 = vunpack.c.l.b16 %v1624
    %v1760 = vunpack.c.l.b16 %v1625
    %v1761 = vunpack.c.l.b16 %v1626
    %v1762 = vunpack.c.l.b16 %v1627
    %v1763 = vunpack.c.l.b16 %v1628
    %v1764 = vunpack.c.l.b16 %v1629
    %v1765 = vunpack.c.l.b16 %v1630
    %v1766 = vunpack.c.l.b16 %v1631
    %v1767 = vunpack.c.l.b16 %v1632
    %v1768 = vunpack.c.l.b16 %v1633
    %v1769 = vunpack.c.l.b16 %v1634
    %v1770 = vunpack.c.l.b16 %v1635
    %v1771 = vunpack.c.l.b16 %v1636
    %v1772 = vunpack.c.l.b16 %v1637
    %v1773 = vunpack.c.l.b16 %v1638
    %v1774 = vunpack.c.l.b16 %v1639
    %v1775 = vunpack.c.l.b16 %v1640
    %v1776 = vunpack.c.l.b16 %v1641
    %v1777 = vunpack.c.l.b16 %v1642
    %v1778 = vunpack.c.l.b16 %v1643
    %v1779 = vunpack.c.l.b16 %v1644
    %v1780 = vunpack.c.l.b16 %v1645
    %v1781 = vunpack.c.l.b16 %v1646
    %v1782 = vunpack.c.l.b16 %v1647
    %v1783 = vunpack.c.l.b16 %v1648
    %v1784 = vunpack.c.l.b16 %v1649
    %v1785 = vunpack.c.l.b16 %v1650
    %v1786 = vunpack.c.l.b16 %v1651
    %v1787 = vunpack.c.l.b16 %v1652
    %v1788 = vunpack.c.l.b16 %v1653
    %v1789 = vunpack.c.l.b16 %v1654
    %v1790 = vunpack.c.l.b16 %v1655
    %v1791 = vunpack.c.l.b16 %v1656
    %v1792 = vunpack.c.l.b16 %v1657
    %v1793 = vunpack.c.l.b16 %v1658
    %v1794 = vunpack.c.l.b16 %v1659
    %v1795 = vunpack.c.l.b16 %v1660
    %v1796 = vunpack.c.l.b16 %v1661
    %v1797 = vunpack.c.l.b16 %v1662
    %v1798 = vunpack.c.l.b16 %v1663
    %v1799 = vunpack.c.l.b16 %v1664
    %v1800 = vpack.c.b16 %v1737, %v1736
    %v1801 = vpack.c.b16 %v1739, %v1738
    %v1802 = vpack.c.b16 %v1741, %v1740
    %v1803 = vpack.c.b16 %v1743, %v1742
    %v1804 = vpack.c.b16 %v1745, %v1744
    %v1805 = vpack.c.b16 %v1747, %v1746
    %v1806 = vpack.c.b16 %v1749, %v1748
    %v1807 = vpack.c.b16 %v1751, %v1750
    %v1808 = vpack.c.b16 %v1753, %v1752
    %v1809 = vpack.c.b16 %v1755, %v1754
    %v1810 = vpack.c.b16 %v1757, %v1756
    %v1811 = vpack.c.b16 %v1759, %v1758
    %v1812 = vpack.c.b16 %v1761, %v1760
    %v1813 = vpack.c.b16 %v1763, %v1762
    %v1814 = vpack.c.b16 %v1765, %v1764
    %v1815 = vpack.c.b16 %v1767, %v1766
    %v1816 = vpack.c.b16 %v1769, %v1768
    %v1817 = vpack.c.b16 %v1771, %v1770
    %v1818 = vpack.c.b16 %v1773, %v1772
    %v1819 = vpack.c.b16 %v1775, %v1774
    %v1820 = vpack.c.b16 %v1777, %v1776
    %v1821 = vpack.c.b16 %v1779, %v1778
    %v1822 = vpack.c.b16 %v1781, %v1780
    %v1823 = vpack.c.b16 %v1783, %v1782
    %v1824 = vpack.c.b16 %v1785, %v1784
    %v1825 = vpack.c.b16 %v1787, %v1786
    %v1826 = vpack.c.b16 %v1789, %v1788
    %v1827 = vpack.c.b16 %v1791, %v1790
    %v1828 = vpack.c.b16 %v1793, %v1792
    %v1829 = vpack.c.b16 %v1795, %v1794
    %v1830 = vpack.c.b16 %v1797, %v1796
    %v1831 = vpack.c.b16 %v1799, %v1798
    %1864 = vmatprep.subr.bf16.mxu0 0
    %1865 = vmatpush1.bf16.msra.mxu0 %v1807
    %1866 = vmatprep.subr.bf16.mxu0 0
    %1867 = vmatpush1.bf16.msra.mxu0 %v1806
    %1868 = vmatprep.subr.bf16.mxu0 0
    %1869 = vmatpush1.bf16.msra.mxu0 %v1805
    %1870 = vmatprep.subr.bf16.mxu0 0
    %1871 = vmatpush1.bf16.msra.mxu0 %v1804
    %1872 = vmatprep.subr.bf16.mxu0 0
    %1873 = vmatpush1.bf16.msra.mxu0 %v1803
    %1874 = vmatprep.subr.bf16.mxu0 0
    %1875 = vmatpush1.bf16.msra.mxu0 %v1802
    %1876 = vmatprep.subr.bf16.mxu0 0
    %1877 = vmatpush1.bf16.msra.mxu0 %v1801
    %1878 = vmatprep.subr.bf16.mxu0 0
    %1879 = vmatpush1.bf16.msra.mxu0 %v1800
    %1880 = vmatprep.subr.bf16.mxu0 0
    %1881 = vmatpush2.bf16.msra.mxu0 %v1815
    %1882 = vmatprep.subr.bf16.mxu0 0
    %1883 = vmatpush2.bf16.msra.mxu0 %v1814
    %1884 = vmatprep.subr.bf16.mxu0 0
    %1885 = vmatpush2.bf16.msra.mxu0 %v1813
    %1886 = vmatprep.subr.bf16.mxu0 0
    %1887 = vmatpush2.bf16.msra.mxu0 %v1812
    %1888 = vmatprep.subr.bf16.mxu0 0
    %1889 = vmatpush2.bf16.msra.mxu0 %v1811
    %1890 = vmatprep.subr.bf16.mxu0 0
    %1891 = vmatpush2.bf16.msra.mxu0 %v1810
    %1892 = vmatprep.subr.bf16.mxu0 0
    %1893 = vmatpush2.bf16.msra.mxu0 %v1809
    %1894 = vmatprep.subr.bf16.mxu0 0
    %1895 = vmatpush2.bf16.msra.mxu0 %v1808
    %1896 = vmatprep.mubr.bf16.mxu0 %v1598
    %1897 = vmatmul.mubr.bf16.gmra.mxu0 %v1597
    %v1898 = vpop.f32.mrf.mxu0
    %v1899 = vadd.f32 %v1670, %v1898
    %v1900 = vpop.f32.mrf.mxu0
    %v1901 = vpop.f32.mrf.mxu0
    %v1902 = vadd.f32 %v1670, %v1901
    %v1903 = vpop.f32.mrf.mxu0
    %1904 = vdwg.mxu0
    %1905 = vmatprep.subr.bf16.mxu0 0
    %1906 = vmatpush1.bf16.msra.mxu0 %v1823
    %1907 = vmatprep.subr.bf16.mxu0 0
    %1908 = vmatpush1.bf16.msra.mxu0 %v1822
    %1909 = vmatprep.subr.bf16.mxu0 0
    %1910 = vmatpush1.bf16.msra.mxu0 %v1821
    %1911 = vmatprep.subr.bf16.mxu0 0
    %1912 = vmatpush1.bf16.msra.mxu0 %v1820
    %1913 = vmatprep.subr.bf16.mxu0 0
    %1914 = vmatpush1.bf16.msra.mxu0 %v1819
    %1915 = vmatprep.subr.bf16.mxu0 0
    %1916 = vmatpush1.bf16.msra.mxu0 %v1818
    %1917 = vmatprep.subr.bf16.mxu0 0
    %1918 = vmatpush1.bf16.msra.mxu0 %v1817
    %1919 = vmatprep.subr.bf16.mxu0 0
    %1920 = vmatpush1.bf16.msra.mxu0 %v1816
    %1921 = vmatprep.subr.bf16.mxu0 0
    %1922 = vmatpush2.bf16.msra.mxu0 %v1831
    %1923 = vmatprep.subr.bf16.mxu0 0
    %1924 = vmatpush2.bf16.msra.mxu0 %v1830
    %1925 = vmatprep.subr.bf16.mxu0 0
    %1926 = vmatpush2.bf16.msra.mxu0 %v1829
    %1927 = vmatprep.subr.bf16.mxu0 0
    %1928 = vmatpush2.bf16.msra.mxu0 %v1828
    %1929 = vmatprep.subr.bf16.mxu0 0
    %1930 = vmatpush2.bf16.msra.mxu0 %v1827
    %1931 = vmatprep.subr.bf16.mxu0 0
    %1932 = vmatpush2.bf16.msra.mxu0 %v1826
    %1933 = vmatprep.subr.bf16.mxu0 0
    %1934 = vmatpush2.bf16.msra.mxu0 %v1825
    %1935 = vmatprep.subr.bf16.mxu0 0
    %1936 = vmatpush2.bf16.msra.mxu0 %v1824
    %1937 = vmatprep.mubr.bf16.mxu0 %v1600
    %1938 = vmatmul.mubr.bf16.gmra.mxu0 %v1599
    %v1939 = vpop.f32.mrf.mxu0
    %v1940 = vadd.f32 %v1899, %v1939
    %v1941 = vpop.f32.mrf.mxu0
    %v1942 = vpop.f32.mrf.mxu0
    %v1943 = vadd.f32 %v1902, %v1942
    %v1944 = vpop.f32.mrf.mxu0
    %1945 = vdwg.mxu0
    %1946 = vmax.xlane.f32.xlu0 %v1940
    %v1947 = vpop.xlane.xlu0 %1946
    %1948 = vmax.xlane.f32.xlu0 %v1943
    %v1949 = vpop.xlane.xlu0 %1948
    %v1950 = vsub.f32 %v1940, %v1947
    %v1951 = vsub.f32 %v1943, %v1949
    %v1952 = vmul.f32 %v1950, 1.442695
    %v1953 = vpow.pop %v1952
    %v1954 = vmul.f32 %v1951, 1.442695
    %v1955 = vpow.pop %v1954
    %v1956 = vld [vmem:[#allocation11] sm:$0xff]
    %v1957 = vld [vmem:[#allocation11 + $0x8] sm:$0xff]
    %v1958 = vld [vmem:[#allocation11 + $0x10] sm:$0xff]
    %v1959 = vld [vmem:[#allocation11 + $0x18] sm:$0xff]
    %v1960 = vld [vmem:[#allocation11 + $0x20] sm:$0xff]
    %v1961 = vld [vmem:[#allocation11 + $0x28] sm:$0xff]
    %v1962 = vld [vmem:[#allocation11 + $0x30] sm:$0xff]
    %v1963 = vld [vmem:[#allocation11 + $0x38] sm:$0xff]
    %v1964 = vld [vmem:[#allocation11 + $0x40] sm:$0xff]
    %v1965 = vld [vmem:[#allocation11 + $0x48] sm:$0xff]
    %v1966 = vld [vmem:[#allocation11 + $0x50] sm:$0xff]
    %v1967 = vld [vmem:[#allocation11 + $0x58] sm:$0xff]
    %v1968 = vld [vmem:[#allocation11 + $0x60] sm:$0xff]
    %v1969 = vld [vmem:[#allocation11 + $0x68] sm:$0xff]
    %v1970 = vld [vmem:[#allocation11 + $0x70] sm:$0xff]
    %v1971 = vld [vmem:[#allocation11 + $0x78] sm:$0xff]
    %1972 = vmatprep.subr.mxu0 0.0
    %1973 = vmatpush1.msra.mxu0 %v1971
    %1974 = vmatprep.subr.mxu0 0.0
    %1975 = vmatpush1.msra.mxu0 %v1970
    %1976 = vmatprep.subr.mxu0 0.0
    %1977 = vmatpush1.msra.mxu0 %v1969
    %1978 = vmatprep.subr.mxu0 0.0
    %1979 = vmatpush1.msra.mxu0 %v1968
    %1980 = vmatprep.subr.mxu0 0.0
    %1981 = vmatpush1.msra.mxu0 %v1967
    %1982 = vmatprep.subr.mxu0 0.0
    %1983 = vmatpush1.msra.mxu0 %v1966
    %1984 = vmatprep.subr.mxu0 0.0
    %1985 = vmatpush1.msra.mxu0 %v1965
    %1986 = vmatprep.subr.mxu0 0.0
    %1987 = vmatpush1.msra.mxu0 %v1964
    %1988 = vmatprep.subr.mxu0 0.0
    %1989 = vmatpush1.msra.mxu0 %v1963
    %1990 = vmatprep.subr.mxu0 0.0
    %1991 = vmatpush1.msra.mxu0 %v1962
    %1992 = vmatprep.subr.mxu0 0.0
    %1993 = vmatpush1.msra.mxu0 %v1961
    %1994 = vmatprep.subr.mxu0 0.0
    %1995 = vmatpush1.msra.mxu0 %v1960
    %1996 = vmatprep.subr.mxu0 0.0
    %1997 = vmatpush1.msra.mxu0 %v1959
    %1998 = vmatprep.subr.mxu0 0.0
    %1999 = vmatpush1.msra.mxu0 %v1958
    %2000 = vmatprep.subr.mxu0 0.0
    %2001 = vmatpush1.msra.mxu0 %v1957
    %2002 = vmatprep.subr.mxu0 0.0
    %2003 = vmatpush1.msra.mxu0 %v1956
    %2004 = vmatprep.subr.mxu0 0.0
    %2005 = vmatpush2.msra.mxu0 0.0
    %2006 = vmatprep.subr.mxu0 0.0
    %2007 = vmatpush2.msra.mxu0 0.0
    %2008 = vmatprep.subr.mxu0 0.0
    %2009 = vmatpush2.msra.mxu0 0.0
    %2010 = vmatprep.subr.mxu0 0.0
    %2011 = vmatpush2.msra.mxu0 0.0
    %2012 = vmatprep.subr.mxu0 0.0
    %2013 = vmatpush2.msra.mxu0 0.0
    %2014 = vmatprep.subr.mxu0 0.0
    %2015 = vmatpush2.msra.mxu0 0.0
    %2016 = vmatprep.subr.mxu0 0.0
    %2017 = vmatpush2.msra.mxu0 0.0
    %2018 = vmatprep.subr.mxu0 0.0
    %2019 = vmatpush2.msra.mxu0 0.0
    %2020 = vmatprep.subr.mxu0 0.0
    %2021 = vmatpush2.msra.mxu0 0.0
    %2022 = vmatprep.subr.mxu0 0.0
    %2023 = vmatpush2.msra.mxu0 0.0
    %2024 = vmatprep.subr.mxu0 0.0
    %2025 = vmatpush2.msra.mxu0 0.0
    %2026 = vmatprep.subr.mxu0 0.0
    %2027 = vmatpush2.msra.mxu0 0.0
    %2028 = vmatprep.subr.mxu0 0.0
    %2029 = vmatpush2.msra.mxu0 0.0
    %2030 = vmatprep.subr.mxu0 0.0
    %2031 = vmatpush2.msra.mxu0 0.0
    %2032 = vmatprep.subr.mxu0 0.0
    %2033 = vmatpush2.msra.mxu0 0.0
    %2034 = vmatprep.subr.mxu0 0.0
    %2035 = vmatpush2.msra.mxu0 0.0
    %2036 = vmatprep.mubr.f32.mxu0 0.0
    %2037 = vmatmul.mubr.f32.gmra.mxu0 %v1953
    %v2038 = vpop.f32.mrf.mxu0
    %v2039 = vadd.f32 0.0, %v2038
    %v2040 = vpop.f32.mrf.mxu0
    %2041 = vmatprep.mubr.f32.mxu0 0.0
    %2042 = vmatmul.mubr.f32.gmra.mxu0 %v1955
    %v2043 = vpop.f32.mrf.mxu0
    %v2044 = vadd.f32 0.0, %v2043
    %v2045 = vpop.f32.mrf.mxu0
    %2046 = vdwg.mxu0
    %v2047 = vlog2.pop %v2039
    %v2048 = vmul.f32 %v2047, 0.6931472
    %v2049 = vlog2.pop %v2044
    %v2050 = vmul.f32 %v2049, 0.6931472
    %v2051 = vsub.f32 %v1950, %v2048
    %v2052 = vsub.f32 %v1951, %v2050
    %2053 = vst [vmem:[#allocation13] sm:$0xff] %v2051
    %2054 = vst [vmem:[#allocation13 + $0x8] sm:$0xff] %v2052
    // Predicated region
    $region58: #{tpu_custom_call.1} parent=1 // pred_check
      _
    $region59: #{tpu_custom_call.1} parent=1 // pred_check_branch
      %2056 = sbr.rel (0) target = $region61
    $region60: #{tpu_custom_call.1} parent=1 // pred_region
      %s2058 = ssub.s32 256, 256
      %2059 = vsyncadd [#allocation4], %s2058
      %s2060 = sshll.u32 [#allocation13], 4
      %s2061 = int_to_ptr.vmem [resolvable:$true] %s2060
      %2066 = dma.vmem_to_hbm [thread:$0]  %s2061, 256, %s8, [#allocation4], 128, 128, 8
    $region61: #{tpu_custom_call.1} parent=1 // pred_fallthru
      _
    // Predicated region
    $region62: #{tpu_custom_call.1} parent=1 // pred_check
      _
    $region63: #{tpu_custom_call.1} parent=1 // pred_check_branch
      %2068 = sbr.rel (0) target = $region65
    $region64: #{tpu_custom_call.1} parent=1 // pred_region
      %2069 = dma.done [#allocation4], 256
    $region65: #{tpu_custom_call.1} parent=1 // pred_fallthru
      _
    %2070 = vsyncpa [#allocation3], 1
    %2071 = vsyncpa [#allocation6], 1
    %2072 = vsyncpa [#allocation9], 1
    %2073 = vsyncpa [#allocation12], 1
    %2074 = vsyncpa [#allocation4], 1

</llo_original>
